<compile_context>
chip_gen: v6e
topology: v6e:2x2x1
jax: 0.10.0
libtpu: 0.0.40
codegen_flags: <defaults>
</compile_context>

<pallas_src>
import jax
import jax.numpy as jnp
from jax.experimental import pallas as pl
from jax.experimental.pallas import tpu as pltpu

EPS = 1e-5
DIMS = ((1024, 512), (512, 256), (256, 128))
MAX_BATCH = 4096  # keeps the resident layer-1 scratch + epilogue under budget


def _pick_chunk(b):
    """Largest batch-chunk <= 512 that divides B (B must be a multiple of 8)."""
    for c in (512, 256, 128, 64, 32, 16, 8):
        if b % c == 0:
            return c
    raise ValueError("batch size must be a multiple of 8")


def _bn_relu(y, sum_row, sq_row, gamma, beta, out_dtype):
    """Training-mode BatchNorm + ReLU epilogue, fused to one mul + one add +
    one max + one cast over the (B, out) tensor.  Stats math stays on (1, out)
    rows in f32; rsqrt goes to the EUP."""
    inv_b = 1.0 / y.shape[0]                      # static block shape
    mean = sum_row * inv_b
    var = jnp.maximum(sq_row * inv_b - mean * mean, 0.0)  # biased var (PyTorch BN)
    scale = gamma * jax.lax.rsqrt(var + EPS)
    shift = beta - mean * scale
    return jnp.maximum(y * scale + shift, 0.0).astype(out_dtype)


def _fp_kernel(x_ref, w1_ref, w2_ref, w3_ref, bn_ref, o_ref,
               y1_ref, s1_ref, q1_ref):
    c = pl.program_id(0)
    chunk = x_ref.shape[0]

    @pl.when(c == 0)
    def _():
        s1_ref[...] = jnp.zeros_like(s1_ref)
        q1_ref[...] = jnp.zeros_like(q1_ref)

    # ---- Layer 1: streamed over batch chunks (x DMA overlaps the matmul). ----
    xc = x_ref[...].astype(jnp.bfloat16)          # in-kernel, per-chunk cast
    y = jnp.dot(xc, w1_ref[...], preferred_element_type=jnp.float32)
    start = pl.multiple_of(c * chunk, chunk)
    y1_ref[pl.ds(start, chunk), :] = y
    s1_ref[...] += jnp.sum(y, axis=0, keepdims=True)
    q1_ref[...] += jnp.sum(y * y, axis=0, keepdims=True)

    # ---- Last chunk: finish layer-1 BN/ReLU, then layers 2 & 3 fully fused. --
    @pl.when(c == pl.num_programs(0) - 1)
    def _():
        g1, b1 = bn_ref[0:1, :], bn_ref[1:2, :]
        g2, b2 = bn_ref[2:3, 0:256], bn_ref[3:4, 0:256]
        g3, b3 = bn_ref[4:5, 0:128], bn_ref[5:6, 0:128]

        h1 = _bn_relu(y1_ref[...], s1_ref[...], q1_ref[...],
                      g1, b1, jnp.bfloat16)
        y2 = jnp.dot(h1, w2_ref[...], preferred_element_type=jnp.float32)
        h2 = _bn_relu(y2,
                      jnp.sum(y2, axis=0, keepdims=True),
                      jnp.sum(y2 * y2, axis=0, keepdims=True),
                      g2, b2, jnp.bfloat16)
        y3 = jnp.dot(h2, w3_ref[...], preferred_element_type=jnp.float32)
        o_ref[...] = _bn_relu(y3,
                              jnp.sum(y3, axis=0, keepdims=True),
                              jnp.sum(y3 * y3, axis=0, keepdims=True),
                              g3, b3, o_ref.dtype)


def fp_model_forward(x, params, chunk=None):
    """x: (B, 1024) float32 -> (B, 128) float32."""
    B = x.shape[0]
    assert B % 8 == 0, f"batch must be a multiple of 8, got {B}"
    assert B <= MAX_BATCH, f"fused path supports B <= {MAX_BATCH}, got {B}"
    # Linear biases are intentionally NOT passed: they cancel exactly under
    # the training-mode BatchNorm that follows each Linear.
    w1, _b1, w2, _b2, w3, _b3, bn = params

    if chunk is None:
        chunk = _pick_chunk(B)
    assert B % chunk == 0 and chunk % 8 == 0, (B, chunk)
    n_chunks = B // chunk

    flops = 2 * B * sum(fi * fo for fi, fo in DIMS)
    bytes_accessed = (B * 1024 * 4                       # x (f32 in HBM)
                      + sum(fi * fo * 2 for fi, fo in DIMS)  # bf16 weights
                      + 8 * 512 * 4                      # packed BN slab
                      + B * 128 * 4)                     # output
    grid_spec = pltpu.PrefetchScalarGridSpec(
        num_scalar_prefetch=0,
        grid=(n_chunks,),
        in_specs=[
            pl.BlockSpec((chunk, 1024), lambda c: (c, 0)),   # x, streamed
            pl.BlockSpec((1024, 512), lambda c: (0, 0)),     # w1, resident
            pl.BlockSpec((512, 256), lambda c: (0, 0)),      # w2, resident
            pl.BlockSpec((256, 128), lambda c: (0, 0)),      # w3, resident
            pl.BlockSpec((8, 512), lambda c: (0, 0)),        # packed BN params
        ],
        # Constant block index -> output stays resident, one lane-dense
        # (B, 128) writeback after the last grid step.
        out_specs=pl.BlockSpec((B, 128), lambda c: (0, 0)),
        scratch_shapes=[
            pltpu.VMEM((B, 512), jnp.float32),   # layer-1 pre-BN activations
            pltpu.VMEM((1, 512), jnp.float32),   # layer-1 running sum
            pltpu.VMEM((1, 512), jnp.float32),   # layer-1 running sum-of-squares
        ],
    )

    return pl.pallas_call(
        _fp_kernel,
        out_shape=jax.ShapeDtypeStruct((B, 128), jnp.float32),
        grid_spec=grid_spec,
        compiler_params=pltpu.CompilerParams(
            dimension_semantics=("arbitrary",),   # stat-accumulation axis
            vmem_limit_bytes=48 << 20,            # headroom on v7x (64 MiB)
        ),
        cost_estimate=pl.CostEstimate(
            flops=flops, transcendentals=896, bytes_accessed=bytes_accessed),
    )(x, w1, w2, w3, bn)


def init_params(key):
    """Deterministic params mirroring the PyTorch module shapes.

    Linear weights stored as (in, out) bfloat16; Linear biases kept f32 for
    the reference only (they cancel in the kernel); BN gamma/beta packed into
    a single (8, 512) f32 slab: rows 2i / 2i+1 hold layer-i gamma / beta in
    the first `out_i` lanes."""
    ws, bs = [], []
    bn = jnp.zeros((8, 512), jnp.float32)
    for i, (fin, fout) in enumerate(DIMS):
        key, kw, kb, kg, kbe = jax.random.split(key, 5)
        bound = 1.0 / (fin ** 0.5)
        w = jax.random.uniform(kw, (fin, fout), jnp.float32, -bound, bound)
        b = jax.random.uniform(kb, (1, fout), jnp.float32, -bound, bound)
        gamma = 1.0 + 0.1 * jax.random.normal(kg, (fout,), jnp.float32)
        beta = 0.1 * jax.random.normal(kbe, (fout,), jnp.float32)
        bn = bn.at[2 * i, :fout].set(gamma)
        bn = bn.at[2 * i + 1, :fout].set(beta)
        ws.append(w.astype(jnp.bfloat16))
        bs.append(b)
    return (ws[0], bs[0], ws[1], bs[1], ws[2], bs[2], bn)


def _reference(x, params):
    """Pure-JAX reference with the kernel's mixed-precision numerics (bf16
    matmul inputs, f32 accumulation, f32 one-pass BN stats).  The Linear bias
    IS applied here to confirm that dropping it in the kernel is exact under
    training-mode BatchNorm."""
    w1, b1, w2, b2, w3, b3, bn = params

    def layer(h, w, b, g, be):
        y = jnp.dot(h.astype(jnp.bfloat16), w,
                    preferred_element_type=jnp.float32) + b
        mean = jnp.mean(y, axis=0, keepdims=True)
        var = jnp.maximum(jnp.mean(y * y, axis=0, keepdims=True) - mean * mean,
                          0.0)
        return jnp.maximum((y - mean) * jax.lax.rsqrt(var + EPS) * g + be, 0.0)

    h = layer(x, w1, b1, bn[0:1, :512], bn[1:2, :512])
    h = layer(h, w2, b2, bn[2:3, :256], bn[3:4, :256])
    h = layer(h, w3, b3, bn[4:5, :128], bn[5:6, :128])
    return h


if __name__ == "__main__":
    key = jax.random.PRNGKey(0)
    key, kx = jax.random.split(key)

    B = 32  # small batch; chunk=8 below exercises the multi-chunk streamed path
    x = jax.random.normal(kx, (B, 1024), jnp.float32)
    params = init_params(key)

    out = jax.block_until_ready(fp_model_forward(x, params, chunk=8))
    ref = _reference(x, params)

    assert out.shape == (B, 128), out.shape
    max_err = float(jnp.max(jnp.abs(out - ref)))
    assert jnp.allclose(out, ref, atol=5e-3, rtol=5e-3), (
        f"mismatch vs reference, max abs err = {max_err}")

    print("KERNEL_OK")
</pallas_src>

<mosaic_0001>
module attributes {stable_mosaic.version = 11 : i64} {
  func.func @_fp_kernel(%arg0: i32, %arg1: memref<8x1024xf32, #tpu.memory_space<vmem>>, %arg2: memref<1024x512xbf16, #tpu.memory_space<vmem>>, %arg3: memref<512x256xbf16, #tpu.memory_space<vmem>>, %arg4: memref<256x128xbf16, #tpu.memory_space<vmem>>, %arg5: memref<8x512xf32, #tpu.memory_space<vmem>>, %arg6: memref<32x128xf32, #tpu.memory_space<vmem>>, %arg7: memref<32x512xf32, #tpu.memory_space<vmem>>, %arg8: memref<1x512xf32, #tpu.memory_space<vmem>>, %arg9: memref<1x512xf32, #tpu.memory_space<vmem>>) attributes {dimension_semantics = [#tpu.dimension_semantics<arbitrary>], iteration_bounds = array<i64: 4>, scalar_prefetch = 0 : i64, scratch_operands = 3 : i64, tpu.core_type = #tpu.core_type<tc>, window_params = [{transform_indices = @transform_0, window_bounds = array<i64: 8, 1024>}, {pipeline_mode = #tpu.pipeline_mode<synchronous>, transform_indices = @transform_1, window_bounds = array<i64: 1024, 512>}, {pipeline_mode = #tpu.pipeline_mode<synchronous>, transform_indices = @transform_2, window_bounds = array<i64: 512, 256>}, {pipeline_mode = #tpu.pipeline_mode<synchronous>, transform_indices = @transform_3, window_bounds = array<i64: 256, 128>}, {pipeline_mode = #tpu.pipeline_mode<synchronous>, transform_indices = @transform_4, window_bounds = array<i64: 8, 512>}, {pipeline_mode = #tpu.pipeline_mode<synchronous>, transform_indices = @transform_5, window_bounds = array<i64: 32, 128>}]} {
    %c0_i32 = arith.constant 0 : i32
    %0 = arith.cmpi eq, %arg0, %c0_i32 : i32
    %1 = arith.extui %0 : i1 to i32
    %c0_i32_0 = arith.constant 0 : i32
    %2 = arith.cmpi ne, %1, %c0_i32_0 : i32
    scf.if %2 {
      %cst_16 = arith.constant 0.000000e+00 : f32
      %25 = vector.broadcast %cst_16 : f32 to vector<1x512xf32>
      %c0_17 = arith.constant 0 : index
      %c0_18 = arith.constant 0 : index
      %26 = vector.load %arg8[%c0_17, %c0_18] : memref<1x512xf32, #tpu.memory_space<vmem>>, vector<1x512xf32>
      tpu.vector_store %arg8[%c0_17, %c0_18], %25 {strides = array<i32>} : memref<1x512xf32, #tpu.memory_space<vmem>>, vector<1x512xf32>,
      %cst_19 = arith.constant 0.000000e+00 : f32
      %27 = vector.broadcast %cst_19 : f32 to vector<1x512xf32>
      %c0_20 = arith.constant 0 : index
      %c0_21 = arith.constant 0 : index
      %28 = vector.load %arg9[%c0_20, %c0_21] : memref<1x512xf32, #tpu.memory_space<vmem>>, vector<1x512xf32>
      tpu.vector_store %arg9[%c0_20, %c0_21], %27 {strides = array<i32>} : memref<1x512xf32, #tpu.memory_space<vmem>>, vector<1x512xf32>,
    } else {
    }
    %c0 = arith.constant 0 : index
    %c0_1 = arith.constant 0 : index
    %3 = vector.load %arg1[%c0, %c0_1] : memref<8x1024xf32, #tpu.memory_space<vmem>>, vector<8x1024xf32>
    %4 = arith.truncf %3 : vector<8x1024xf32> to vector<8x1024xbf16>
    %c0_2 = arith.constant 0 : index
    %c0_3 = arith.constant 0 : index
    %5 = vector.load %arg2[%c0_2, %c0_3] : memref<1024x512xbf16, #tpu.memory_space<vmem>>, vector<1024x512xbf16>
    %cst = arith.constant dense<0.000000e+00> : vector<8x512xf32>
    %6 = tpu.matmul %4, %5, %cst {dimension_numbers = #tpu.dot_dimension_numbers<[1], [0], [0], [1], [0, 0, 1, 1], [], []>} : vector<8x1024xbf16>, vector<1024x512xbf16>, vector<8x512xf32> -> vector<8x512xf32>
    %c8_i32 = arith.constant 8 : i32
    %7 = arith.muli %arg0, %c8_i32 : i32
    %8 = tpu.assume_multiple %7, 8 : i32
    %9 = arith.index_cast %8 : i32 to index
    %c0_4 = arith.constant 0 : index
    %10 = vector.load %arg7[%9, %c0_4] : memref<32x512xf32, #tpu.memory_space<vmem>>, vector<8x512xf32>
    tpu.vector_store %arg7[%9, %c0_4], %6 {strides = array<i32>} : memref<32x512xf32, #tpu.memory_space<vmem>>, vector<8x512xf32>,
    %c0_5 = arith.constant 0 : index
    %c0_6 = arith.constant 0 : index
    %11 = vector.load %arg8[%c0_5, %c0_6] : memref<1x512xf32, #tpu.memory_space<vmem>>, vector<1x512xf32>
    %cst_7 = arith.constant dense<0.000000e+00> : vector<512xf32>
    %12 = vector.multi_reduction <add>, %6, %cst_7 [0] : vector<8x512xf32> to vector<512xf32>
    %13 = vector.shape_cast %12 : vector<512xf32> to vector<1x512xf32>
    %14 = arith.addf %11, %13 : vector<1x512xf32>
    %c0_8 = arith.constant 0 : index
    %c0_9 = arith.constant 0 : index
    %15 = vector.load %arg8[%c0_8, %c0_9] : memref<1x512xf32, #tpu.memory_space<vmem>>, vector<1x512xf32>
    tpu.vector_store %arg8[%c0_8, %c0_9], %14 {strides = array<i32>} : memref<1x512xf32, #tpu.memory_space<vmem>>, vector<1x512xf32>,
    %c0_10 = arith.constant 0 : index
    %c0_11 = arith.constant 0 : index
    %16 = vector.load %arg9[%c0_10, %c0_11] : memref<1x512xf32, #tpu.memory_space<vmem>>, vector<1x512xf32>
    %17 = arith.mulf %6, %6 : vector<8x512xf32>
    %cst_12 = arith.constant dense<0.000000e+00> : vector<512xf32>
    %18 = vector.multi_reduction <add>, %17, %cst_12 [0] : vector<8x512xf32> to vector<512xf32>
    %19 = vector.shape_cast %18 : vector<512xf32> to vector<1x512xf32>
    %20 = arith.addf %16, %19 : vector<1x512xf32>
    %c0_13 = arith.constant 0 : index
    %c0_14 = arith.constant 0 : index
    %21 = vector.load %arg9[%c0_13, %c0_14] : memref<1x512xf32, #tpu.memory_space<vmem>>, vector<1x512xf32>
    tpu.vector_store %arg9[%c0_13, %c0_14], %20 {strides = array<i32>} : memref<1x512xf32, #tpu.memory_space<vmem>>, vector<1x512xf32>,
    %c3_i32 = arith.constant 3 : i32
    %22 = arith.cmpi eq, %arg0, %c3_i32 : i32
    %23 = arith.extui %22 : i1 to i32
    %c0_i32_15 = arith.constant 0 : i32
    %24 = arith.cmpi ne, %23, %c0_i32_15 : i32
    scf.if %24 {
      %c0_16 = arith.constant 0 : index
      %c0_17 = arith.constant 0 : index
      %25 = vector.load %arg5[%c0_16, %c0_17] : memref<8x512xf32, #tpu.memory_space<vmem>>, vector<1x512xf32>
      %c1 = arith.constant 1 : index
      %c0_18 = arith.constant 0 : index
      %26 = vector.load %arg5[%c1, %c0_18] : memref<8x512xf32, #tpu.memory_space<vmem>>, vector<1x512xf32>
      %c2 = arith.constant 2 : index
      %c0_19 = arith.constant 0 : index
      %27 = vector.load %arg5[%c2, %c0_19] : memref<8x512xf32, #tpu.memory_space<vmem>>, vector<1x256xf32>
      %c3 = arith.constant 3 : index
      %c0_20 = arith.constant 0 : index
      %28 = vector.load %arg5[%c3, %c0_20] : memref<8x512xf32, #tpu.memory_space<vmem>>, vector<1x256xf32>
      %c4 = arith.constant 4 : index
      %c0_21 = arith.constant 0 : index
      %29 = vector.load %arg5[%c4, %c0_21] : memref<8x512xf32, #tpu.memory_space<vmem>>, vector<1x128xf32>
      %c5 = arith.constant 5 : index
      %c0_22 = arith.constant 0 : index
      %30 = vector.load %arg5[%c5, %c0_22] : memref<8x512xf32, #tpu.memory_space<vmem>>, vector<1x128xf32>
      %c0_23 = arith.constant 0 : index
      %c0_24 = arith.constant 0 : index
      %31 = vector.load %arg7[%c0_23, %c0_24] : memref<32x512xf32, #tpu.memory_space<vmem>>, vector<32x512xf32>
      %c0_25 = arith.constant 0 : index
      %c0_26 = arith.constant 0 : index
      %32 = vector.load %arg8[%c0_25, %c0_26] : memref<1x512xf32, #tpu.memory_space<vmem>>, vector<1x512xf32>
      %c0_27 = arith.constant 0 : index
      %c0_28 = arith.constant 0 : index
      %33 = vector.load %arg9[%c0_27, %c0_28] : memref<1x512xf32, #tpu.memory_space<vmem>>, vector<1x512xf32>
      %cst_29 = arith.constant 3.125000e-02 : f32
      %34 = vector.broadcast %cst_29 : f32 to vector<1x512xf32>
      %35 = arith.mulf %32, %34 : vector<1x512xf32>
      %cst_30 = arith.constant 3.125000e-02 : f32
      %36 = vector.broadcast %cst_30 : f32 to vector<1x512xf32>
      %37 = arith.mulf %33, %36 : vector<1x512xf32>
      %38 = arith.mulf %35, %35 : vector<1x512xf32>
      %39 = arith.subf %37, %38 : vector<1x512xf32>
      %cst_31 = arith.constant 0.000000e+00 : f32
      %40 = vector.broadcast %cst_31 : f32 to vector<1x512xf32>
      %41 = arith.maximumf %39, %40 : vector<1x512xf32>
      %cst_32 = arith.constant 9.99999974E-6 : f32
      %42 = vector.broadcast %cst_32 : f32 to vector<1x512xf32>
      %43 = arith.addf %41, %42 : vector<1x512xf32>
      %44 = math.rsqrt %43 : vector<1x512xf32>
      %45 = arith.mulf %25, %44 : vector<1x512xf32>
      %46 = arith.mulf %35, %45 : vector<1x512xf32>
      %47 = arith.subf %26, %46 : vector<1x512xf32>
      %48 = vector.broadcast %45 : vector<1x512xf32> to vector<32x512xf32>
      %49 = arith.mulf %31, %48 : vector<32x512xf32>
      %50 = vector.broadcast %47 : vector<1x512xf32> to vector<32x512xf32>
      %51 = arith.addf %49, %50 : vector<32x512xf32>
      %cst_33 = arith.constant 0.000000e+00 : f32
      %52 = vector.broadcast %cst_33 : f32 to vector<32x512xf32>
      %53 = arith.maximumf %51, %52 : vector<32x512xf32>
      %54 = arith.truncf %53 : vector<32x512xf32> to vector<32x512xbf16>
      %c0_34 = arith.constant 0 : index
      %c0_35 = arith.constant 0 : index
      %55 = vector.load %arg3[%c0_34, %c0_35] : memref<512x256xbf16, #tpu.memory_space<vmem>>, vector<512x256xbf16>
      %cst_36 = arith.constant dense<0.000000e+00> : vector<32x256xf32>
      %56 = tpu.matmul %54, %55, %cst_36 {dimension_numbers = #tpu.dot_dimension_numbers<[1], [0], [0], [1], [0, 0, 1, 1], [], []>} : vector<32x512xbf16>, vector<512x256xbf16>, vector<32x256xf32> -> vector<32x256xf32>
      %cst_37 = arith.constant dense<0.000000e+00> : vector<256xf32>
      %57 = vector.multi_reduction <add>, %56, %cst_37 [0] : vector<32x256xf32> to vector<256xf32>
      %58 = vector.shape_cast %57 : vector<256xf32> to vector<1x256xf32>
      %59 = arith.mulf %56, %56 : vector<32x256xf32>
      %cst_38 = arith.constant dense<0.000000e+00> : vector<256xf32>
      %60 = vector.multi_reduction <add>, %59, %cst_38 [0] : vector<32x256xf32> to vector<256xf32>
      %61 = vector.shape_cast %60 : vector<256xf32> to vector<1x256xf32>
      %cst_39 = arith.constant 3.125000e-02 : f32
      %62 = vector.broadcast %cst_39 : f32 to vector<1x256xf32>
      %63 = arith.mulf %58, %62 : vector<1x256xf32>
      %cst_40 = arith.constant 3.125000e-02 : f32
      %64 = vector.broadcast %cst_40 : f32 to vector<1x256xf32>
      %65 = arith.mulf %61, %64 : vector<1x256xf32>
      %66 = arith.mulf %63, %63 : vector<1x256xf32>
      %67 = arith.subf %65, %66 : vector<1x256xf32>
      %cst_41 = arith.constant 0.000000e+00 : f32
      %68 = vector.broadcast %cst_41 : f32 to vector<1x256xf32>
      %69 = arith.maximumf %67, %68 : vector<1x256xf32>
      %cst_42 = arith.constant 9.99999974E-6 : f32
      %70 = vector.broadcast %cst_42 : f32 to vector<1x256xf32>
      %71 = arith.addf %69, %70 : vector<1x256xf32>
      %72 = math.rsqrt %71 : vector<1x256xf32>
      %73 = arith.mulf %27, %72 : vector<1x256xf32>
      %74 = arith.mulf %63, %73 : vector<1x256xf32>
      %75 = arith.subf %28, %74 : vector<1x256xf32>
      %76 = vector.broadcast %73 : vector<1x256xf32> to vector<32x256xf32>
      %77 = arith.mulf %56, %76 : vector<32x256xf32>
      %78 = vector.broadcast %75 : vector<1x256xf32> to vector<32x256xf32>
      %79 = arith.addf %77, %78 : vector<32x256xf32>
      %cst_43 = arith.constant 0.000000e+00 : f32
      %80 = vector.broadcast %cst_43 : f32 to vector<32x256xf32>
      %81 = arith.maximumf %79, %80 : vector<32x256xf32>
      %82 = arith.truncf %81 : vector<32x256xf32> to vector<32x256xbf16>
      %c0_44 = arith.constant 0 : index
      %c0_45 = arith.constant 0 : index
      %83 = vector.load %arg4[%c0_44, %c0_45] : memref<256x128xbf16, #tpu.memory_space<vmem>>, vector<256x128xbf16>
      %cst_46 = arith.constant dense<0.000000e+00> : vector<32x128xf32>
      %84 = tpu.matmul %82, %83, %cst_46 {dimension_numbers = #tpu.dot_dimension_numbers<[1], [0], [0], [1], [0, 0, 1, 1], [], []>} : vector<32x256xbf16>, vector<256x128xbf16>, vector<32x128xf32> -> vector<32x128xf32>
      %cst_47 = arith.constant dense<0.000000e+00> : vector<128xf32>
      %85 = vector.multi_reduction <add>, %84, %cst_47 [0] : vector<32x128xf32> to vector<128xf32>
      %86 = vector.shape_cast %85 : vector<128xf32> to vector<1x128xf32>
      %87 = arith.mulf %84, %84 : vector<32x128xf32>
      %cst_48 = arith.constant dense<0.000000e+00> : vector<128xf32>
      %88 = vector.multi_reduction <add>, %87, %cst_48 [0] : vector<32x128xf32> to vector<128xf32>
      %89 = vector.shape_cast %88 : vector<128xf32> to vector<1x128xf32>
      %cst_49 = arith.constant 3.125000e-02 : f32
      %90 = vector.broadcast %cst_49 : f32 to vector<1x128xf32>
      %91 = arith.mulf %86, %90 : vector<1x128xf32>
      %cst_50 = arith.constant 3.125000e-02 : f32
      %92 = vector.broadcast %cst_50 : f32 to vector<1x128xf32>
      %93 = arith.mulf %89, %92 : vector<1x128xf32>
      %94 = arith.mulf %91, %91 : vector<1x128xf32>
      %95 = arith.subf %93, %94 : vector<1x128xf32>
      %cst_51 = arith.constant 0.000000e+00 : f32
      %96 = vector.broadcast %cst_51 : f32 to vector<1x128xf32>
      %97 = arith.maximumf %95, %96 : vector<1x128xf32>
      %cst_52 = arith.constant 9.99999974E-6 : f32
      %98 = vector.broadcast %cst_52 : f32 to vector<1x128xf32>
      %99 = arith.addf %97, %98 : vector<1x128xf32>
      %100 = math.rsqrt %99 : vector<1x128xf32>
      %101 = arith.mulf %29, %100 : vector<1x128xf32>
      %102 = arith.mulf %91, %101 : vector<1x128xf32>
      %103 = arith.subf %30, %102 : vector<1x128xf32>
      %104 = vector.broadcast %101 : vector<1x128xf32> to vector<32x128xf32>
      %105 = arith.mulf %84, %104 : vector<32x128xf32>
      %106 = vector.broadcast %103 : vector<1x128xf32> to vector<32x128xf32>
      %107 = arith.addf %105, %106 : vector<32x128xf32>
      %cst_53 = arith.constant 0.000000e+00 : f32
      %108 = vector.broadcast %cst_53 : f32 to vector<32x128xf32>
      %109 = arith.maximumf %107, %108 : vector<32x128xf32>
      %c0_54 = arith.constant 0 : index
      %c0_55 = arith.constant 0 : index
      %110 = vector.load %arg6[%c0_54, %c0_55] : memref<32x128xf32, #tpu.memory_space<vmem>>, vector<32x128xf32>
      tpu.vector_store %arg6[%c0_54, %c0_55], %109 {strides = array<i32>} : memref<32x128xf32, #tpu.memory_space<vmem>>, vector<32x128xf32>,
    } else {
    }
    return
  }
  func.func @transform_0(%arg0: i32) -> (i32, i32) {
    %c0_i32 = arith.constant 0 : i32
    %c0_i32_0 = arith.constant 0 : i32
    return %arg0, %c0_i32 : i32, i32
  }
  func.func @transform_1(%arg0: i32) -> (i32, i32) {
    %c0_i32 = arith.constant 0 : i32
    %c0_i32_0 = arith.constant 0 : i32
    %c0_i32_1 = arith.constant 0 : i32
    return %c0_i32, %c0_i32_0 : i32, i32
  }
  func.func @transform_2(%arg0: i32) -> (i32, i32) {
    %c0_i32 = arith.constant 0 : i32
    %c0_i32_0 = arith.constant 0 : i32
    %c0_i32_1 = arith.constant 0 : i32
    return %c0_i32, %c0_i32_0 : i32, i32
  }
  func.func @transform_3(%arg0: i32) -> (i32, i32) {
    %c0_i32 = arith.constant 0 : i32
    %c0_i32_0 = arith.constant 0 : i32
    %c0_i32_1 = arith.constant 0 : i32
    return %c0_i32, %c0_i32_0 : i32, i32
  }
  func.func @transform_4(%arg0: i32) -> (i32, i32) {
    %c0_i32 = arith.constant 0 : i32
    %c0_i32_0 = arith.constant 0 : i32
    %c0_i32_1 = arith.constant 0 : i32
    return %c0_i32, %c0_i32_0 : i32, i32
  }
  func.func @transform_5(%arg0: i32) -> (i32, i32) {
    %c0_i32 = arith.constant 0 : i32
    %c0_i32_0 = arith.constant 0 : i32
    %c0_i32_1 = arith.constant 0 : i32
    return %c0_i32, %c0_i32_0 : i32, i32
  }
}

</mosaic_0001>

<llo_original>
// kernel: tpu_custom_call.1
$region0: #{tpu_custom_call.1}
  #allocation0 [shape = 'u32[]', space=smem, size = 0x4, offset = 0x4, fixed_abs, tag = 'smem constant byte address 0x4 - core index']
  #allocation1 [shape = 'u32[144,128]{1,0:T(1,128)}', space=vmem, size = 0x12000, scoped, tag = 'internal scratch']
  #allocation2 [shape = 'f32[32,512]{1,0:T(8,128)}', space=vmem, size = 0x10000, scoped, tag = 'scratch operand']
  #allocation3 [shape = 'f32[1,512]{1,0:T(1,128)}', space=vmem, size = 0x800, scoped, tag = 'scratch operand']
  #allocation4 [shape = 'f32[1,512]{1,0:T(1,128)}', space=vmem, size = 0x800, scoped, tag = 'scratch operand']
  %s0 = inlined_call_operand.hbm [shape: f32[32,1024], index: 0, kind: input, shape index: {}]
  %s1 = inlined_call_operand.hbm [shape: bf16[1024,512], index: 1, kind: input, shape index: {}]
  %s2 = inlined_call_operand.hbm [shape: bf16[512,256], index: 2, kind: input, shape index: {}]
  %s3 = inlined_call_operand.hbm [shape: bf16[256,128], index: 3, kind: input, shape index: {}]
  %s4 = inlined_call_operand.hbm [shape: f32[8,512], index: 4, kind: input, shape index: {}]
  %s5 = inlined_call_operand.hbm [shape: f32[32,128], index: 5, kind: output, shape index: {}]
  %s6 = sld [smem:[#allocation0]]
  $region81: #{tpu_custom_call.1} parent=0
    _
  %s8 = ssub.s32 1, %s6
  %s9 = scalar_select 0, %s8, %s6
  $region1: #{tpu_custom_call.1} parent=0
    #allocation5 [shape = 'u8[65536]{0}', space=vmem, size = 0x10000, scoped, tag = 'input window, operand 0']
    #allocation6 [shape = 's32[2]{0}', space=sflag, size = 0x8, scoped, tag = 'scoped memory for tpu_custom_call.1']
    #allocation7 [shape = 's32[2]{0}', space=sflag, size = 0x8, scoped, tag = 'scoped memory for tpu_custom_call.1']
    #allocation8 [shape = 'u8[1048576]{0}', space=vmem, size = 0x100000, scoped, tag = 'input window, operand 1, single buffered']
    #allocation9 [shape = 's32[1]{0}', space=sflag, size = 0x4, scoped, tag = 'scoped memory for tpu_custom_call.1']
    #allocation10 [shape = 'u8[262144]{0}', space=vmem, size = 0x40000, scoped, tag = 'input window, operand 2, single buffered']
    #allocation11 [shape = 'u8[65536]{0}', space=vmem, size = 0x10000, scoped, tag = 'input window, operand 3, single buffered']
    #allocation12 [shape = 's32[1]{0}', space=sflag, size = 0x4, scoped, tag = 'scoped memory for tpu_custom_call.1']
    #allocation13 [shape = 'u8[16384]{0}', space=vmem, size = 0x4000, scoped, tag = 'input window, operand 4, single buffered']
    #allocation14 [shape = 'u8[16384]{0}', space=vmem, size = 0x4000, scoped, tag = 'output window, operand 0, single buffered']
    %10 = vsyncpa [#allocation6], 0
    %s11 = scalar_lea.sflag [#allocation6], 1
    %12 = vsyncpa %s11, 0
    %13 = vsyncpa [#allocation9], 0
    %14 = vsyncpa [#allocation12], 0
    %15 = vsyncpa [#allocation7], 0
    loop: start=0, step=1, limit=6
    $region2: #{tpu_custom_call.1} parent=1 // loop_pre_header
      _
    $region3: #{tpu_custom_call.1} parent=1 // loop_header
      %s17 = sphi 0, %s21
      %p18 = scmp.ge.s32.totalorder %s17, 6
      %s27 = sphi 0, %s29
      %s30 = sphi 0, %s27
      %s31 = sphi 0, %s30
      %s47 = sphi 0, %s31
      %s51 = sphi 0, %s51
      %s53 = sphi 0, %s51
      %s54 = sphi 0, %s53
      %s68 = sphi 0, %s54
      %s72 = sphi 0, %s72
      %s74 = sphi 0, %s72
      %s75 = sphi 0, %s74
      %s89 = sphi 0, %s75
      %s93 = sphi 0, %s93
      %s95 = sphi 0, %s93
      %s96 = sphi 0, %s95
      %s110 = sphi 0, %s96
      %s114 = sphi 0, %s114
      %s116 = sphi 0, %s114
      %s117 = sphi 0, %s116
      %s131 = sphi 0, %s117
      %s135 = sphi 0, %s135
      %s137 = sphi 0, %s135
      %s138 = sphi 0, %s137
      %s152 = sphi 0, %s138
    $region4: #{tpu_custom_call.1} parent=1 // loop_header_branch
      %20 = sbr.rel (%p18) target = $region8
    $region5: #{tpu_custom_call.1} parent=1 // loop_body
      %s22 = ssub.s32 %s17, 1
      %s23 = ssub.s32 %s17, 2
      %s24 = sadd.s32 %s17, 1
      %s25 = ssub.s32 %s17, %s24
      %p26 = scmp.eq.s32.totalorder %s25, 0
      %s28 = sadd.s32 %s27, 1
      %s29 = scalar_select %p26, %s27, %s28
      %p32 = pneg %p26
      %p33 = scmp.eq.s32.totalorder %s17, 3
      %p34 = por %p32, %p33
      %p35 = scmp.ne.s32.totalorder %s27, %s30
      %p36 = scmp.eq.s32.totalorder %s17, 0
      %p37 = por %p35, %p36
      %p38 = scmp.ne.s32.totalorder %s27, %s30
      %p39 = scmp.eq.s32.totalorder %s22, 3
      %p40 = por %p38, %p39
      %p41 = scmp.ne.s32.totalorder %s30, %s31
      %p42 = scmp.eq.s32.totalorder %s22, 0
      %p43 = por %p41, %p42
      %p44 = scmp.ne.s32.totalorder %s30, %s31
      %p45 = scmp.eq.s32.totalorder %s23, 3
      %p46 = por %p44, %p45
      %p48 = scmp.ne.s32.totalorder %s31, %s47
      %p49 = scmp.eq.s32.totalorder %s23, 0
      %p50 = por %p48, %p49
      %s52 = sadd.s32 %s51, 1
      %p55 = scmp.eq.s32.totalorder %s17, 3
      %p56 = scmp.ne.s32.totalorder %s51, %s53
      %p57 = scmp.eq.s32.totalorder %s17, 0
      %p58 = por %p56, %p57
      %p59 = scmp.ne.s32.totalorder %s51, %s53
      %p60 = scmp.eq.s32.totalorder %s22, 3
      %p61 = por %p59, %p60
      %p62 = scmp.ne.s32.totalorder %s53, %s54
      %p63 = scmp.eq.s32.totalorder %s22, 0
      %p64 = por %p62, %p63
      %p65 = scmp.ne.s32.totalorder %s53, %s54
      %p66 = scmp.eq.s32.totalorder %s23, 3
      %p67 = por %p65, %p66
      %p69 = scmp.ne.s32.totalorder %s54, %s68
      %p70 = scmp.eq.s32.totalorder %s23, 0
      %p71 = por %p69, %p70
      %s73 = sadd.s32 %s72, 1
      %p76 = scmp.eq.s32.totalorder %s17, 3
      %p77 = scmp.ne.s32.totalorder %s72, %s74
      %p78 = scmp.eq.s32.totalorder %s17, 0
      %p79 = por %p77, %p78
      %p80 = scmp.ne.s32.totalorder %s72, %s74
      %p81 = scmp.eq.s32.totalorder %s22, 3
      %p82 = por %p80, %p81
      %p83 = scmp.ne.s32.totalorder %s74, %s75
      %p84 = scmp.eq.s32.totalorder %s22, 0
      %p85 = por %p83, %p84
      %p86 = scmp.ne.s32.totalorder %s74, %s75
      %p87 = scmp.eq.s32.totalorder %s23, 3
      %p88 = por %p86, %p87
      %p90 = scmp.ne.s32.totalorder %s75, %s89
      %p91 = scmp.eq.s32.totalorder %s23, 0
      %p92 = por %p90, %p91
      %s94 = sadd.s32 %s93, 1
      %p97 = scmp.eq.s32.totalorder %s17, 3
      %p98 = scmp.ne.s32.totalorder %s93, %s95
      %p99 = scmp.eq.s32.totalorder %s17, 0
      %p100 = por %p98, %p99
      %p101 = scmp.ne.s32.totalorder %s93, %s95
      %p102 = scmp.eq.s32.totalorder %s22, 3
      %p103 = por %p101, %p102
      %p104 = scmp.ne.s32.totalorder %s95, %s96
      %p105 = scmp.eq.s32.totalorder %s22, 0
      %p106 = por %p104, %p105
      %p107 = scmp.ne.s32.totalorder %s95, %s96
      %p108 = scmp.eq.s32.totalorder %s23, 3
      %p109 = por %p107, %p108
      %p111 = scmp.ne.s32.totalorder %s96, %s110
      %p112 = scmp.eq.s32.totalorder %s23, 0
      %p113 = por %p111, %p112
      %s115 = sadd.s32 %s114, 1
      %p118 = scmp.eq.s32.totalorder %s17, 3
      %p119 = scmp.ne.s32.totalorder %s114, %s116
      %p120 = scmp.eq.s32.totalorder %s17, 0
      %p121 = por %p119, %p120
      %p122 = scmp.ne.s32.totalorder %s114, %s116
      %p123 = scmp.eq.s32.totalorder %s22, 3
      %p124 = por %p122, %p123
      %p125 = scmp.ne.s32.totalorder %s116, %s117
      %p126 = scmp.eq.s32.totalorder %s22, 0
      %p127 = por %p125, %p126
      %p128 = scmp.ne.s32.totalorder %s116, %s117
      %p129 = scmp.eq.s32.totalorder %s23, 3
      %p130 = por %p128, %p129
      %p132 = scmp.ne.s32.totalorder %s117, %s131
      %p133 = scmp.eq.s32.totalorder %s23, 0
      %p134 = por %p132, %p133
      %s136 = sadd.s32 %s135, 1
      %p139 = scmp.eq.s32.totalorder %s17, 3
      %p140 = scmp.ne.s32.totalorder %s135, %s137
      %p141 = scmp.eq.s32.totalorder %s17, 0
      %p142 = por %p140, %p141
      %p143 = scmp.ne.s32.totalorder %s135, %s137
      %p144 = scmp.eq.s32.totalorder %s22, 3
      %p145 = por %p143, %p144
      %p146 = scmp.ne.s32.totalorder %s137, %s138
      %p147 = scmp.eq.s32.totalorder %s22, 0
      %p148 = por %p146, %p147
      %p149 = scmp.ne.s32.totalorder %s137, %s138
      %p150 = scmp.eq.s32.totalorder %s23, 3
      %p151 = por %p149, %p150
      %p153 = scmp.ne.s32.totalorder %s138, %s152
      %p154 = scmp.eq.s32.totalorder %s23, 0
      %p155 = por %p153, %p154
      %p156 = scmp.le.s32.totalorder 1, %s17
      %p157 = scmp.lt.s32.totalorder %s17, 5
      %p158 = pnand %p156, %p157
      %p159 = pneg %p158
      // Predicated region
      $region9: #{tpu_custom_call.1} parent=5 // pred_check
        _
      $region10: #{tpu_custom_call.1} parent=5 // pred_check_branch
        %161 = sbr.rel (%p158) target = $region12
      $region11: #{tpu_custom_call.1} parent=5 // pred_region
        %s162 = ssub.s32 %s17, 1
        // Predicated region
        $region13: #{tpu_custom_call.1} parent=11 // pred_check
          %p163 = pneg %p64
        $region14: #{tpu_custom_call.1} parent=11 // pred_check_branch
          %165 = sbr.rel (%p163) target = $region16
        $region15: #{tpu_custom_call.1} parent=11 // pred_region
          %s167 = ssub.s32 32768, 32768
          %168 = vsyncadd [#allocation9], %s167
          %s169 = sshll.u32 [#allocation8], 4
          %s170 = int_to_ptr.vmem [resolvable:$true] %s169
          %175 = dma.hbm_to_vmem [thread:$0]  %s1, 32768, %s170, [#allocation9], 256, 256, 16
        $region16: #{tpu_custom_call.1} parent=11 // pred_fallthru
          _
        // Predicated region
        $region17: #{tpu_custom_call.1} parent=11 // pred_check
          %p176 = pneg %p85
        $region18: #{tpu_custom_call.1} parent=11 // pred_check_branch
          %178 = sbr.rel (%p176) target = $region20
        $region19: #{tpu_custom_call.1} parent=11 // pred_region
          %s180 = ssub.s32 8192, 8192
          %181 = vsyncadd [#allocation9], %s180
          %s182 = sshll.u32 [#allocation10], 4
          %s183 = int_to_ptr.vmem [resolvable:$true] %s182
          %188 = dma.hbm_to_vmem [thread:$0]  %s2, 8192, %s183, [#allocation9], 128, 128, 8
        $region20: #{tpu_custom_call.1} parent=11 // pred_fallthru
          _
        // Predicated region
        $region21: #{tpu_custom_call.1} parent=11 // pred_check
          %p189 = pneg %p106
        $region22: #{tpu_custom_call.1} parent=11 // pred_check_branch
          %191 = sbr.rel (%p189) target = $region24
        $region23: #{tpu_custom_call.1} parent=11 // pred_region
          %s193 = ssub.s32 2048, 2048
          %194 = vsyncadd [#allocation12], %s193
          %s195 = sshll.u32 [#allocation11], 4
          %s196 = int_to_ptr.vmem [resolvable:$true] %s195
          %201 = dma.hbm_to_vmem [thread:$0]  %s3, 2048, %s196, [#allocation12], 64, 64, 4
        $region24: #{tpu_custom_call.1} parent=11 // pred_fallthru
          _
        // Predicated region
        $region25: #{tpu_custom_call.1} parent=11 // pred_check
          %p202 = pneg %p127
        $region26: #{tpu_custom_call.1} parent=11 // pred_check_branch
          %204 = sbr.rel (%p202) target = $region28
        $region27: #{tpu_custom_call.1} parent=11 // pred_region
          %s206 = ssub.s32 512, 512
          %207 = vsyncadd [#allocation12], %s206
          %s209 = sshll.u32 [#allocation13], 4
          %s210 = int_to_ptr.vmem [resolvable:$true] %s209
          %212 = dma.hbm_to_vmem [thread:$0]  %s4, 512, %s210, [#allocation12]
        $region28: #{tpu_custom_call.1} parent=11 // pred_fallthru
          _
      $region12: #{tpu_custom_call.1} parent=5 // pred_fallthru
        _
      %p213 = scmp.lt.s32.totalorder %s17, 4
      // Predicated region
      $region29: #{tpu_custom_call.1} parent=5 // pred_check
        %p214 = pneg %p213
      $region30: #{tpu_custom_call.1} parent=5 // pred_check_branch
        %216 = sbr.rel (%p214) target = $region32
      $region31: #{tpu_custom_call.1} parent=5 // pred_region
        // Predicated region
        $region33: #{tpu_custom_call.1} parent=31 // pred_check
          %p217 = pneg %p37
        $region34: #{tpu_custom_call.1} parent=31 // pred_check_branch
          %219 = sbr.rel (%p217) target = $region36
        $region35: #{tpu_custom_call.1} parent=31 // pred_region
          %s220 = sand.u32 %s27, 1
          %s221 = scalar_lea.sflag [#allocation6], %s220
          %s222 = sand.u32 %s27, 1
          %s223 = smul.addr %s222, 64
          %s224 = scalar_lea.vmem [#allocation5], %s223
          %s226 = ssub.s32 1024, 1024
          %227 = vsyncadd %s221, %s226
          %s228 = smul.addr %s17, 8
          %s229 = smul.addr %s228, 128
          %s230 = scalar_lea.hbm %s0, %s229
          %s232 = sshll.u32 %s224, 4
          %s233 = int_to_ptr.vmem [resolvable:$true] %s232
          %235 = dma.hbm_to_vmem [thread:$0]  %s230, 1024, %s233, %s221
        $region36: #{tpu_custom_call.1} parent=31 // pred_fallthru
          _
      $region32: #{tpu_custom_call.1} parent=5 // pred_fallthru
        _
      %p236 = scmp.le.s32.totalorder 1, %s17
      %p237 = scmp.lt.s32.totalorder %s17, 5
      %p238 = pnand %p236, %p237
      %p239 = pneg %p238
      // Predicated region
      $region37: #{tpu_custom_call.1} parent=5 // pred_check
        _
      $region38: #{tpu_custom_call.1} parent=5 // pred_check_branch
        %241 = sbr.rel (%p238) target = $region40
      $region39: #{tpu_custom_call.1} parent=5 // pred_region
        %s242 = ssub.s32 %s17, 1
        %s243 = sand.u32 %s30, 1
        %s244 = scalar_lea.sflag [#allocation6], %s243
        %s245 = sand.u32 %s30, 1
        %s246 = smul.addr %s245, 64
        %s247 = scalar_lea.vmem [#allocation5], %s246
        // Predicated region
        $region41: #{tpu_custom_call.1} parent=39 // pred_check
          %p248 = pneg %p43
        $region42: #{tpu_custom_call.1} parent=39 // pred_check_branch
          %250 = sbr.rel (%p248) target = $region44
        $region43: #{tpu_custom_call.1} parent=39 // pred_region
          %251 = dma.done %s244, 1024
        $region44: #{tpu_custom_call.1} parent=39 // pred_fallthru
          _
        // Predicated region
        $region45: #{tpu_custom_call.1} parent=39 // pred_check
          %p252 = pneg %p64
        $region46: #{tpu_custom_call.1} parent=39 // pred_check_branch
          %254 = sbr.rel (%p252) target = $region48
        $region47: #{tpu_custom_call.1} parent=39 // pred_region
          %255 = dma.done [#allocation9], 32768
        $region48: #{tpu_custom_call.1} parent=39 // pred_fallthru
          _
        // Predicated region
        $region49: #{tpu_custom_call.1} parent=39 // pred_check
          %p256 = pneg %p85
        $region50: #{tpu_custom_call.1} parent=39 // pred_check_branch
          %258 = sbr.rel (%p256) target = $region52
        $region51: #{tpu_custom_call.1} parent=39 // pred_region
          %259 = dma.done [#allocation9], 8192
        $region52: #{tpu_custom_call.1} parent=39 // pred_fallthru
          _
        // Predicated region
        $region53: #{tpu_custom_call.1} parent=39 // pred_check
          %p260 = pneg %p106
        $region54: #{tpu_custom_call.1} parent=39 // pred_check_branch
          %262 = sbr.rel (%p260) target = $region56
        $region55: #{tpu_custom_call.1} parent=39 // pred_region
          %263 = dma.done [#allocation12], 2048
        $region56: #{tpu_custom_call.1} parent=39 // pred_fallthru
          _
        // Predicated region
        $region57: #{tpu_custom_call.1} parent=39 // pred_check
          %p264 = pneg %p127
        $region58: #{tpu_custom_call.1} parent=39 // pred_check_branch
          %266 = sbr.rel (%p264) target = $region60
        $region59: #{tpu_custom_call.1} parent=39 // pred_region
          %267 = dma.done [#allocation12], 512
        $region60: #{tpu_custom_call.1} parent=39 // pred_fallthru
          _
        %s268 = sand.u32 %s30, 1
        %s269 = scalar_lea.sflag [#allocation6], %s268
        %s270 = sand.u32 %s30, 1
        %s271 = smul.addr %s270, 64
        %s272 = scalar_lea.vmem [#allocation5], %s271
        %p273 = pneg %p43
        %p274 = pneg %p40
        %p275 = pneg %p64
        %p276 = pneg %p61
        %p277 = pneg %p85
        %p278 = pneg %p82
        %p279 = pneg %p106
        %p280 = pneg %p103
        %p281 = pneg %p127
        %p282 = pneg %p124
        %p283 = pneg %p148
        %p284 = pneg %p145
        %p286 = scmp.eq.s32.totalorder %s22, 0
        // Predicated region
        $region61: #{tpu_custom_call.1} parent=39 // pred_check
          %p287 = pneg %p286
        $region62: #{tpu_custom_call.1} parent=39 // pred_check_branch
          %289 = sbr.rel (%p287) target = $region64
        $region63: #{tpu_custom_call.1} parent=39 // pred_region
          %v290 = vlaneseq
          %vm291 = vcmp.ge.s32.totalorder %v290, 0
          %vm292 = vcmp.lt.s32.totalorder %v290, 512
          %vm293 = vmand %vm291, %vm292
          %294 = vst.msk [vmem:[#allocation3] sm:$0xf] %vm293, 0.0
          %295 = vst.msk [vmem:[#allocation4] sm:$0xf] %vm293, 0.0
        $region64: #{tpu_custom_call.1} parent=39 // pred_fallthru
          _
        %v296 = vld [vmem:[%s247] sm:$0xff]
        %v297 = vld [vmem:[%s247 + $0x8] sm:$0xff]
        %v298 = vld [vmem:[%s247 + $0x10] sm:$0xff]
        %v299 = vld [vmem:[%s247 + $0x18] sm:$0xff]
        %v300 = vld [vmem:[%s247 + $0x20] sm:$0xff]
        %v301 = vld [vmem:[%s247 + $0x28] sm:$0xff]
        %v302 = vld [vmem:[%s247 + $0x30] sm:$0xff]
        %v303 = vld [vmem:[%s247 + $0x38] sm:$0xff]
        %v304 = vpack.c.bf16 %v296, %v296
        %v305 = vpack.c.bf16 %v297, %v297
        %v306 = vpack.c.bf16 %v298, %v298
        %v307 = vpack.c.bf16 %v299, %v299
        %v308 = vpack.c.bf16 %v300, %v300
        %v309 = vpack.c.bf16 %v301, %v301
        %v310 = vpack.c.bf16 %v302, %v302
        %v311 = vpack.c.bf16 %v303, %v303
        %v312 = vld [vmem:[#allocation8] sm:$0xff]
        %v313 = vld [vmem:[#allocation8 + $0x8] sm:$0xff]
        %v314 = vld [vmem:[#allocation8 + $0x10] sm:$0xff]
        %v315 = vld [vmem:[#allocation8 + $0x18] sm:$0xff]
        %v316 = vld [vmem:[#allocation8 + $0x20] sm:$0xff]
        %v317 = vld [vmem:[#allocation8 + $0x28] sm:$0xff]
        %v318 = vld [vmem:[#allocation8 + $0x30] sm:$0xff]
        %v319 = vld [vmem:[#allocation8 + $0x38] sm:$0xff]
        %v320 = vld [vmem:[#allocation8 + $0x40] sm:$0xff]
        %v321 = vld [vmem:[#allocation8 + $0x48] sm:$0xff]
        %v322 = vld [vmem:[#allocation8 + $0x50] sm:$0xff]
        %v323 = vld [vmem:[#allocation8 + $0x58] sm:$0xff]
        %v324 = vld [vmem:[#allocation8 + $0x60] sm:$0xff]
        %v325 = vld [vmem:[#allocation8 + $0x68] sm:$0xff]
        %v326 = vld [vmem:[#allocation8 + $0x70] sm:$0xff]
        %v327 = vld [vmem:[#allocation8 + $0x78] sm:$0xff]
        %v328 = vld [vmem:[#allocation8 + $0x80] sm:$0xff]
        %v329 = vld [vmem:[#allocation8 + $0x88] sm:$0xff]
        %v330 = vld [vmem:[#allocation8 + $0x90] sm:$0xff]
        %v331 = vld [vmem:[#allocation8 + $0x98] sm:$0xff]
        %v332 = vld [vmem:[#allocation8 + $0xa0] sm:$0xff]
        %v333 = vld [vmem:[#allocation8 + $0xa8] sm:$0xff]
        %v334 = vld [vmem:[#allocation8 + $0xb0] sm:$0xff]
        %v335 = vld [vmem:[#allocation8 + $0xb8] sm:$0xff]
        %v336 = vld [vmem:[#allocation8 + $0xc0] sm:$0xff]
        %v337 = vld [vmem:[#allocation8 + $0xc8] sm:$0xff]
        %v338 = vld [vmem:[#allocation8 + $0xd0] sm:$0xff]
        %v339 = vld [vmem:[#allocation8 + $0xd8] sm:$0xff]
        %v340 = vld [vmem:[#allocation8 + $0xe0] sm:$0xff]
        %v341 = vld [vmem:[#allocation8 + $0xe8] sm:$0xff]
        %v342 = vld [vmem:[#allocation8 + $0xf0] sm:$0xff]
        %v343 = vld [vmem:[#allocation8 + $0xf8] sm:$0xff]
        %v344 = vld [vmem:[#allocation8 + $0x100] sm:$0xff]
        %v345 = vld [vmem:[#allocation8 + $0x108] sm:$0xff]
        %v346 = vld [vmem:[#allocation8 + $0x110] sm:$0xff]
        %v347 = vld [vmem:[#allocation8 + $0x118] sm:$0xff]
        %v348 = vld [vmem:[#allocation8 + $0x120] sm:$0xff]
        %v349 = vld [vmem:[#allocation8 + $0x128] sm:$0xff]
        %v350 = vld [vmem:[#allocation8 + $0x130] sm:$0xff]
        %v351 = vld [vmem:[#allocation8 + $0x138] sm:$0xff]
        %v352 = vld [vmem:[#allocation8 + $0x140] sm:$0xff]
        %v353 = vld [vmem:[#allocation8 + $0x148] sm:$0xff]
        %v354 = vld [vmem:[#allocation8 + $0x150] sm:$0xff]
        %v355 = vld [vmem:[#allocation8 + $0x158] sm:$0xff]
        %v356 = vld [vmem:[#allocation8 + $0x160] sm:$0xff]
        %v357 = vld [vmem:[#allocation8 + $0x168] sm:$0xff]
        %v358 = vld [vmem:[#allocation8 + $0x170] sm:$0xff]
        %v359 = vld [vmem:[#allocation8 + $0x178] sm:$0xff]
        %v360 = vld [vmem:[#allocation8 + $0x180] sm:$0xff]
        %v361 = vld [vmem:[#allocation8 + $0x188] sm:$0xff]
        %v362 = vld [vmem:[#allocation8 + $0x190] sm:$0xff]
        %v363 = vld [vmem:[#allocation8 + $0x198] sm:$0xff]
        %v364 = vld [vmem:[#allocation8 + $0x1a0] sm:$0xff]
        %v365 = vld [vmem:[#allocation8 + $0x1a8] sm:$0xff]
        %v366 = vld [vmem:[#allocation8 + $0x1b0] sm:$0xff]
        %v367 = vld [vmem:[#allocation8 + $0x1b8] sm:$0xff]
        %v368 = vld [vmem:[#allocation8 + $0x1c0] sm:$0xff]
        %v369 = vld [vmem:[#allocation8 + $0x1c8] sm:$0xff]
        %v370 = vld [vmem:[#allocation8 + $0x1d0] sm:$0xff]
        %v371 = vld [vmem:[#allocation8 + $0x1d8] sm:$0xff]
        %v372 = vld [vmem:[#allocation8 + $0x1e0] sm:$0xff]
        %v373 = vld [vmem:[#allocation8 + $0x1e8] sm:$0xff]
        %v374 = vld [vmem:[#allocation8 + $0x1f0] sm:$0xff]
        %v375 = vld [vmem:[#allocation8 + $0x1f8] sm:$0xff]
        %v376 = vld [vmem:[#allocation8 + $0x200] sm:$0xff]
        %v377 = vld [vmem:[#allocation8 + $0x208] sm:$0xff]
        %v378 = vld [vmem:[#allocation8 + $0x210] sm:$0xff]
        %v379 = vld [vmem:[#allocation8 + $0x218] sm:$0xff]
        %v380 = vld [vmem:[#allocation8 + $0x220] sm:$0xff]
        %v381 = vld [vmem:[#allocation8 + $0x228] sm:$0xff]
        %v382 = vld [vmem:[#allocation8 + $0x230] sm:$0xff]
        %v383 = vld [vmem:[#allocation8 + $0x238] sm:$0xff]
        %v384 = vld [vmem:[#allocation8 + $0x240] sm:$0xff]
        %v385 = vld [vmem:[#allocation8 + $0x248] sm:$0xff]
        %v386 = vld [vmem:[#allocation8 + $0x250] sm:$0xff]
        %v387 = vld [vmem:[#allocation8 + $0x258] sm:$0xff]
        %v388 = vld [vmem:[#allocation8 + $0x260] sm:$0xff]
        %v389 = vld [vmem:[#allocation8 + $0x268] sm:$0xff]
        %v390 = vld [vmem:[#allocation8 + $0x270] sm:$0xff]
        %v391 = vld [vmem:[#allocation8 + $0x278] sm:$0xff]
        %v392 = vld [vmem:[#allocation8 + $0x280] sm:$0xff]
        %v393 = vld [vmem:[#allocation8 + $0x288] sm:$0xff]
        %v394 = vld [vmem:[#allocation8 + $0x290] sm:$0xff]
        %v395 = vld [vmem:[#allocation8 + $0x298] sm:$0xff]
        %v396 = vld [vmem:[#allocation8 + $0x2a0] sm:$0xff]
        %v397 = vld [vmem:[#allocation8 + $0x2a8] sm:$0xff]
        %v398 = vld [vmem:[#allocation8 + $0x2b0] sm:$0xff]
        %v399 = vld [vmem:[#allocation8 + $0x2b8] sm:$0xff]
        %v400 = vld [vmem:[#allocation8 + $0x2c0] sm:$0xff]
        %v401 = vld [vmem:[#allocation8 + $0x2c8] sm:$0xff]
        %v402 = vld [vmem:[#allocation8 + $0x2d0] sm:$0xff]
        %v403 = vld [vmem:[#allocation8 + $0x2d8] sm:$0xff]
        %v404 = vld [vmem:[#allocation8 + $0x2e0] sm:$0xff]
        %v405 = vld [vmem:[#allocation8 + $0x2e8] sm:$0xff]
        %v406 = vld [vmem:[#allocation8 + $0x2f0] sm:$0xff]
        %v407 = vld [vmem:[#allocation8 + $0x2f8] sm:$0xff]
        %v408 = vld [vmem:[#allocation8 + $0x300] sm:$0xff]
        %v409 = vld [vmem:[#allocation8 + $0x308] sm:$0xff]
        %v410 = vld [vmem:[#allocation8 + $0x310] sm:$0xff]
        %v411 = vld [vmem:[#allocation8 + $0x318] sm:$0xff]
        %v412 = vld [vmem:[#allocation8 + $0x320] sm:$0xff]
        %v413 = vld [vmem:[#allocation8 + $0x328] sm:$0xff]
        %v414 = vld [vmem:[#allocation8 + $0x330] sm:$0xff]
        %v415 = vld [vmem:[#allocation8 + $0x338] sm:$0xff]
        %v416 = vld [vmem:[#allocation8 + $0x340] sm:$0xff]
        %v417 = vld [vmem:[#allocation8 + $0x348] sm:$0xff]
        %v418 = vld [vmem:[#allocation8 + $0x350] sm:$0xff]
        %v419 = vld [vmem:[#allocation8 + $0x358] sm:$0xff]
        %v420 = vld [vmem:[#allocation8 + $0x360] sm:$0xff]
        %v421 = vld [vmem:[#allocation8 + $0x368] sm:$0xff]
        %v422 = vld [vmem:[#allocation8 + $0x370] sm:$0xff]
        %v423 = vld [vmem:[#allocation8 + $0x378] sm:$0xff]
        %v424 = vld [vmem:[#allocation8 + $0x380] sm:$0xff]
        %v425 = vld [vmem:[#allocation8 + $0x388] sm:$0xff]
        %v426 = vld [vmem:[#allocation8 + $0x390] sm:$0xff]
        %v427 = vld [vmem:[#allocation8 + $0x398] sm:$0xff]
        %v428 = vld [vmem:[#allocation8 + $0x3a0] sm:$0xff]
        %v429 = vld [vmem:[#allocation8 + $0x3a8] sm:$0xff]
        %v430 = vld [vmem:[#allocation8 + $0x3b0] sm:$0xff]
        %v431 = vld [vmem:[#allocation8 + $0x3b8] sm:$0xff]
        %v432 = vld [vmem:[#allocation8 + $0x3c0] sm:$0xff]
        %v433 = vld [vmem:[#allocation8 + $0x3c8] sm:$0xff]
        %v434 = vld [vmem:[#allocation8 + $0x3d0] sm:$0xff]
        %v435 = vld [vmem:[#allocation8 + $0x3d8] sm:$0xff]
        %v436 = vld [vmem:[#allocation8 + $0x3e0] sm:$0xff]
        %v437 = vld [vmem:[#allocation8 + $0x3e8] sm:$0xff]
        %v438 = vld [vmem:[#allocation8 + $0x3f0] sm:$0xff]
        %v439 = vld [vmem:[#allocation8 + $0x3f8] sm:$0xff]
        %v440 = vld [vmem:[#allocation8 + $0x400] sm:$0xff]
        %v441 = vld [vmem:[#allocation8 + $0x408] sm:$0xff]
        %v442 = vld [vmem:[#allocation8 + $0x410] sm:$0xff]
        %v443 = vld [vmem:[#allocation8 + $0x418] sm:$0xff]
        %v444 = vld [vmem:[#allocation8 + $0x420] sm:$0xff]
        %v445 = vld [vmem:[#allocation8 + $0x428] sm:$0xff]
        %v446 = vld [vmem:[#allocation8 + $0x430] sm:$0xff]
        %v447 = vld [vmem:[#allocation8 + $0x438] sm:$0xff]
        %v448 = vld [vmem:[#allocation8 + $0x440] sm:$0xff]
        %v449 = vld [vmem:[#allocation8 + $0x448] sm:$0xff]
        %v450 = vld [vmem:[#allocation8 + $0x450] sm:$0xff]
        %v451 = vld [vmem:[#allocation8 + $0x458] sm:$0xff]
        %v452 = vld [vmem:[#allocation8 + $0x460] sm:$0xff]
        %v453 = vld [vmem:[#allocation8 + $0x468] sm:$0xff]
        %v454 = vld [vmem:[#allocation8 + $0x470] sm:$0xff]
        %v455 = vld [vmem:[#allocation8 + $0x478] sm:$0xff]
        %v456 = vld [vmem:[#allocation8 + $0x480] sm:$0xff]
        %v457 = vld [vmem:[#allocation8 + $0x488] sm:$0xff]
        %v458 = vld [vmem:[#allocation8 + $0x490] sm:$0xff]
        %v459 = vld [vmem:[#allocation8 + $0x498] sm:$0xff]
        %v460 = vld [vmem:[#allocation8 + $0x4a0] sm:$0xff]
        %v461 = vld [vmem:[#allocation8 + $0x4a8] sm:$0xff]
        %v462 = vld [vmem:[#allocation8 + $0x4b0] sm:$0xff]
        %v463 = vld [vmem:[#allocation8 + $0x4b8] sm:$0xff]
        %v464 = vld [vmem:[#allocation8 + $0x4c0] sm:$0xff]
        %v465 = vld [vmem:[#allocation8 + $0x4c8] sm:$0xff]
        %v466 = vld [vmem:[#allocation8 + $0x4d0] sm:$0xff]
        %v467 = vld [vmem:[#allocation8 + $0x4d8] sm:$0xff]
        %v468 = vld [vmem:[#allocation8 + $0x4e0] sm:$0xff]
        %v469 = vld [vmem:[#allocation8 + $0x4e8] sm:$0xff]
        %v470 = vld [vmem:[#allocation8 + $0x4f0] sm:$0xff]
        %v471 = vld [vmem:[#allocation8 + $0x4f8] sm:$0xff]
        %v472 = vld [vmem:[#allocation8 + $0x500] sm:$0xff]
        %v473 = vld [vmem:[#allocation8 + $0x508] sm:$0xff]
        %v474 = vld [vmem:[#allocation8 + $0x510] sm:$0xff]
        %v475 = vld [vmem:[#allocation8 + $0x518] sm:$0xff]
        %v476 = vld [vmem:[#allocation8 + $0x520] sm:$0xff]
        %v477 = vld [vmem:[#allocation8 + $0x528] sm:$0xff]
        %v478 = vld [vmem:[#allocation8 + $0x530] sm:$0xff]
        %v479 = vld [vmem:[#allocation8 + $0x538] sm:$0xff]
        %v480 = vld [vmem:[#allocation8 + $0x540] sm:$0xff]
        %v481 = vld [vmem:[#allocation8 + $0x548] sm:$0xff]
        %v482 = vld [vmem:[#allocation8 + $0x550] sm:$0xff]
        %v483 = vld [vmem:[#allocation8 + $0x558] sm:$0xff]
        %v484 = vld [vmem:[#allocation8 + $0x560] sm:$0xff]
        %v485 = vld [vmem:[#allocation8 + $0x568] sm:$0xff]
        %v486 = vld [vmem:[#allocation8 + $0x570] sm:$0xff]
        %v487 = vld [vmem:[#allocation8 + $0x578] sm:$0xff]
        %v488 = vld [vmem:[#allocation8 + $0x580] sm:$0xff]
        %v489 = vld [vmem:[#allocation8 + $0x588] sm:$0xff]
        %v490 = vld [vmem:[#allocation8 + $0x590] sm:$0xff]
        %v491 = vld [vmem:[#allocation8 + $0x598] sm:$0xff]
        %v492 = vld [vmem:[#allocation8 + $0x5a0] sm:$0xff]
        %v493 = vld [vmem:[#allocation8 + $0x5a8] sm:$0xff]
        %v494 = vld [vmem:[#allocation8 + $0x5b0] sm:$0xff]
        %v495 = vld [vmem:[#allocation8 + $0x5b8] sm:$0xff]
        %v496 = vld [vmem:[#allocation8 + $0x5c0] sm:$0xff]
        %v497 = vld [vmem:[#allocation8 + $0x5c8] sm:$0xff]
        %v498 = vld [vmem:[#allocation8 + $0x5d0] sm:$0xff]
        %v499 = vld [vmem:[#allocation8 + $0x5d8] sm:$0xff]
        %v500 = vld [vmem:[#allocation8 + $0x5e0] sm:$0xff]
        %v501 = vld [vmem:[#allocation8 + $0x5e8] sm:$0xff]
        %v502 = vld [vmem:[#allocation8 + $0x5f0] sm:$0xff]
        %v503 = vld [vmem:[#allocation8 + $0x5f8] sm:$0xff]
        %v504 = vld [vmem:[#allocation8 + $0x600] sm:$0xff]
        %v505 = vld [vmem:[#allocation8 + $0x608] sm:$0xff]
        %v506 = vld [vmem:[#allocation8 + $0x610] sm:$0xff]
        %v507 = vld [vmem:[#allocation8 + $0x618] sm:$0xff]
        %v508 = vld [vmem:[#allocation8 + $0x620] sm:$0xff]
        %v509 = vld [vmem:[#allocation8 + $0x628] sm:$0xff]
        %v510 = vld [vmem:[#allocation8 + $0x630] sm:$0xff]
        %v511 = vld [vmem:[#allocation8 + $0x638] sm:$0xff]
        %v512 = vld [vmem:[#allocation8 + $0x640] sm:$0xff]
        %v513 = vld [vmem:[#allocation8 + $0x648] sm:$0xff]
        %v514 = vld [vmem:[#allocation8 + $0x650] sm:$0xff]
        %v515 = vld [vmem:[#allocation8 + $0x658] sm:$0xff]
        %v516 = vld [vmem:[#allocation8 + $0x660] sm:$0xff]
        %v517 = vld [vmem:[#allocation8 + $0x668] sm:$0xff]
        %v518 = vld [vmem:[#allocation8 + $0x670] sm:$0xff]
        %v519 = vld [vmem:[#allocation8 + $0x678] sm:$0xff]
        %v520 = vld [vmem:[#allocation8 + $0x680] sm:$0xff]
        %v521 = vld [vmem:[#allocation8 + $0x688] sm:$0xff]
        %v522 = vld [vmem:[#allocation8 + $0x690] sm:$0xff]
        %v523 = vld [vmem:[#allocation8 + $0x698] sm:$0xff]
        %v524 = vld [vmem:[#allocation8 + $0x6a0] sm:$0xff]
        %v525 = vld [vmem:[#allocation8 + $0x6a8] sm:$0xff]
        %v526 = vld [vmem:[#allocation8 + $0x6b0] sm:$0xff]
        %v527 = vld [vmem:[#allocation8 + $0x6b8] sm:$0xff]
        %v528 = vld [vmem:[#allocation8 + $0x6c0] sm:$0xff]
        %v529 = vld [vmem:[#allocation8 + $0x6c8] sm:$0xff]
        %v530 = vld [vmem:[#allocation8 + $0x6d0] sm:$0xff]
        %v531 = vld [vmem:[#allocation8 + $0x6d8] sm:$0xff]
        %v532 = vld [vmem:[#allocation8 + $0x6e0] sm:$0xff]
        %v533 = vld [vmem:[#allocation8 + $0x6e8] sm:$0xff]
        %v534 = vld [vmem:[#allocation8 + $0x6f0] sm:$0xff]
        %v535 = vld [vmem:[#allocation8 + $0x6f8] sm:$0xff]
        %v536 = vld [vmem:[#allocation8 + $0x700] sm:$0xff]
        %v537 = vld [vmem:[#allocation8 + $0x708] sm:$0xff]
        %v538 = vld [vmem:[#allocation8 + $0x710] sm:$0xff]
        %v539 = vld [vmem:[#allocation8 + $0x718] sm:$0xff]
        %v540 = vld [vmem:[#allocation8 + $0x720] sm:$0xff]
        %v541 = vld [vmem:[#allocation8 + $0x728] sm:$0xff]
        %v542 = vld [vmem:[#allocation8 + $0x730] sm:$0xff]
        %v543 = vld [vmem:[#allocation8 + $0x738] sm:$0xff]
        %v544 = vld [vmem:[#allocation8 + $0x740] sm:$0xff]
        %v545 = vld [vmem:[#allocation8 + $0x748] sm:$0xff]
        %v546 = vld [vmem:[#allocation8 + $0x750] sm:$0xff]
        %v547 = vld [vmem:[#allocation8 + $0x758] sm:$0xff]
        %v548 = vld [vmem:[#allocation8 + $0x760] sm:$0xff]
        %v549 = vld [vmem:[#allocation8 + $0x768] sm:$0xff]
        %v550 = vld [vmem:[#allocation8 + $0x770] sm:$0xff]
        %v551 = vld [vmem:[#allocation8 + $0x778] sm:$0xff]
        %v552 = vld [vmem:[#allocation8 + $0x780] sm:$0xff]
        %v553 = vld [vmem:[#allocation8 + $0x788] sm:$0xff]
        %v554 = vld [vmem:[#allocation8 + $0x790] sm:$0xff]
        %v555 = vld [vmem:[#allocation8 + $0x798] sm:$0xff]
        %v556 = vld [vmem:[#allocation8 + $0x7a0] sm:$0xff]
        %v557 = vld [vmem:[#allocation8 + $0x7a8] sm:$0xff]
        %v558 = vld [vmem:[#allocation8 + $0x7b0] sm:$0xff]
        %v559 = vld [vmem:[#allocation8 + $0x7b8] sm:$0xff]
        %v560 = vld [vmem:[#allocation8 + $0x7c0] sm:$0xff]
        %v561 = vld [vmem:[#allocation8 + $0x7c8] sm:$0xff]
        %v562 = vld [vmem:[#allocation8 + $0x7d0] sm:$0xff]
        %v563 = vld [vmem:[#allocation8 + $0x7d8] sm:$0xff]
        %v564 = vld [vmem:[#allocation8 + $0x7e0] sm:$0xff]
        %v565 = vld [vmem:[#allocation8 + $0x7e8] sm:$0xff]
        %v566 = vld [vmem:[#allocation8 + $0x7f0] sm:$0xff]
        %v567 = vld [vmem:[#allocation8 + $0x7f8] sm:$0xff]
        %v824 = vunpack.c.l.b16 %v312
        %v825 = vunpack.c.h.b16 %v312
        %v826 = vunpack.c.l.b16 %v313
        %v827 = vunpack.c.h.b16 %v313
        %v828 = vunpack.c.l.b16 %v314
        %v829 = vunpack.c.h.b16 %v314
        %v830 = vunpack.c.l.b16 %v315
        %v831 = vunpack.c.h.b16 %v315
        %v832 = vunpack.c.l.b16 %v316
        %v833 = vunpack.c.h.b16 %v316
        %v834 = vunpack.c.l.b16 %v317
        %v835 = vunpack.c.h.b16 %v317
        %v836 = vunpack.c.l.b16 %v318
        %v837 = vunpack.c.h.b16 %v318
        %v838 = vunpack.c.l.b16 %v319
        %v839 = vunpack.c.h.b16 %v319
        %v840 = vunpack.c.l.b16 %v320
        %v841 = vunpack.c.h.b16 %v320
        %v842 = vunpack.c.l.b16 %v321
        %v843 = vunpack.c.h.b16 %v321
        %v844 = vunpack.c.l.b16 %v322
        %v845 = vunpack.c.h.b16 %v322
        %v846 = vunpack.c.l.b16 %v323
        %v847 = vunpack.c.h.b16 %v323
        %v848 = vunpack.c.l.b16 %v324
        %v849 = vunpack.c.h.b16 %v324
        %v850 = vunpack.c.l.b16 %v325
        %v851 = vunpack.c.h.b16 %v325
        %v852 = vunpack.c.l.b16 %v326
        %v853 = vunpack.c.h.b16 %v326
        %v854 = vunpack.c.l.b16 %v327
        %v855 = vunpack.c.h.b16 %v327
        %v856 = vunpack.c.l.b16 %v328
        %v857 = vunpack.c.h.b16 %v328
        %v858 = vunpack.c.l.b16 %v329
        %v859 = vunpack.c.h.b16 %v329
        %v860 = vunpack.c.l.b16 %v330
        %v861 = vunpack.c.h.b16 %v330
        %v862 = vunpack.c.l.b16 %v331
        %v863 = vunpack.c.h.b16 %v331
        %v864 = vunpack.c.l.b16 %v332
        %v865 = vunpack.c.h.b16 %v332
        %v866 = vunpack.c.l.b16 %v333
        %v867 = vunpack.c.h.b16 %v333
        %v868 = vunpack.c.l.b16 %v334
        %v869 = vunpack.c.h.b16 %v334
        %v870 = vunpack.c.l.b16 %v335
        %v871 = vunpack.c.h.b16 %v335
        %v872 = vunpack.c.l.b16 %v336
        %v873 = vunpack.c.h.b16 %v336
        %v874 = vunpack.c.l.b16 %v337
        %v875 = vunpack.c.h.b16 %v337
        %v876 = vunpack.c.l.b16 %v338
        %v877 = vunpack.c.h.b16 %v338
        %v878 = vunpack.c.l.b16 %v339
        %v879 = vunpack.c.h.b16 %v339
        %v880 = vunpack.c.l.b16 %v340
        %v881 = vunpack.c.h.b16 %v340
        %v882 = vunpack.c.l.b16 %v341
        %v883 = vunpack.c.h.b16 %v341
        %v884 = vunpack.c.l.b16 %v342
        %v885 = vunpack.c.h.b16 %v342
        %v886 = vunpack.c.l.b16 %v343
        %v887 = vunpack.c.h.b16 %v343
        %v888 = vunpack.c.l.b16 %v344
        %v889 = vunpack.c.h.b16 %v344
        %v890 = vunpack.c.l.b16 %v345
        %v891 = vunpack.c.h.b16 %v345
        %v892 = vunpack.c.l.b16 %v346
        %v893 = vunpack.c.h.b16 %v346
        %v894 = vunpack.c.l.b16 %v347
        %v895 = vunpack.c.h.b16 %v347
        %v896 = vunpack.c.l.b16 %v348
        %v897 = vunpack.c.h.b16 %v348
        %v898 = vunpack.c.l.b16 %v349
        %v899 = vunpack.c.h.b16 %v349
        %v900 = vunpack.c.l.b16 %v350
        %v901 = vunpack.c.h.b16 %v350
        %v902 = vunpack.c.l.b16 %v351
        %v903 = vunpack.c.h.b16 %v351
        %v904 = vunpack.c.l.b16 %v352
        %v905 = vunpack.c.h.b16 %v352
        %v906 = vunpack.c.l.b16 %v353
        %v907 = vunpack.c.h.b16 %v353
        %v908 = vunpack.c.l.b16 %v354
        %v909 = vunpack.c.h.b16 %v354
        %v910 = vunpack.c.l.b16 %v355
        %v911 = vunpack.c.h.b16 %v355
        %v912 = vunpack.c.l.b16 %v356
        %v913 = vunpack.c.h.b16 %v356
        %v914 = vunpack.c.l.b16 %v357
        %v915 = vunpack.c.h.b16 %v357
        %v916 = vunpack.c.l.b16 %v358
        %v917 = vunpack.c.h.b16 %v358
        %v918 = vunpack.c.l.b16 %v359
        %v919 = vunpack.c.h.b16 %v359
        %v920 = vunpack.c.l.b16 %v360
        %v921 = vunpack.c.h.b16 %v360
        %v922 = vunpack.c.l.b16 %v361
        %v923 = vunpack.c.h.b16 %v361
        %v924 = vunpack.c.l.b16 %v362
        %v925 = vunpack.c.h.b16 %v362
        %v926 = vunpack.c.l.b16 %v363
        %v927 = vunpack.c.h.b16 %v363
        %v928 = vunpack.c.l.b16 %v364
        %v929 = vunpack.c.h.b16 %v364
        %v930 = vunpack.c.l.b16 %v365
        %v931 = vunpack.c.h.b16 %v365
        %v932 = vunpack.c.l.b16 %v366
        %v933 = vunpack.c.h.b16 %v366
        %v934 = vunpack.c.l.b16 %v367
        %v935 = vunpack.c.h.b16 %v367
        %v936 = vunpack.c.l.b16 %v368
        %v937 = vunpack.c.h.b16 %v368
        %v938 = vunpack.c.l.b16 %v369
        %v939 = vunpack.c.h.b16 %v369
        %v940 = vunpack.c.l.b16 %v370
        %v941 = vunpack.c.h.b16 %v370
        %v942 = vunpack.c.l.b16 %v371
        %v943 = vunpack.c.h.b16 %v371
        %v944 = vunpack.c.l.b16 %v372
        %v945 = vunpack.c.h.b16 %v372
        %v946 = vunpack.c.l.b16 %v373
        %v947 = vunpack.c.h.b16 %v373
        %v948 = vunpack.c.l.b16 %v374
        %v949 = vunpack.c.h.b16 %v374
        %v950 = vunpack.c.l.b16 %v375
        %v951 = vunpack.c.h.b16 %v375
        %v952 = vunpack.c.l.b16 %v376
        %v953 = vunpack.c.h.b16 %v376
        %v954 = vunpack.c.l.b16 %v377
        %v955 = vunpack.c.h.b16 %v377
        %v956 = vunpack.c.l.b16 %v378
        %v957 = vunpack.c.h.b16 %v378
        %v958 = vunpack.c.l.b16 %v379
        %v959 = vunpack.c.h.b16 %v379
        %v960 = vunpack.c.l.b16 %v380
        %v961 = vunpack.c.h.b16 %v380
        %v962 = vunpack.c.l.b16 %v381
        %v963 = vunpack.c.h.b16 %v381
        %v964 = vunpack.c.l.b16 %v382
        %v965 = vunpack.c.h.b16 %v382
        %v966 = vunpack.c.l.b16 %v383
        %v967 = vunpack.c.h.b16 %v383
        %v968 = vunpack.c.l.b16 %v384
        %v969 = vunpack.c.h.b16 %v384
        %v970 = vunpack.c.l.b16 %v385
        %v971 = vunpack.c.h.b16 %v385
        %v972 = vunpack.c.l.b16 %v386
        %v973 = vunpack.c.h.b16 %v386
        %v974 = vunpack.c.l.b16 %v387
        %v975 = vunpack.c.h.b16 %v387
        %v976 = vunpack.c.l.b16 %v388
        %v977 = vunpack.c.h.b16 %v388
        %v978 = vunpack.c.l.b16 %v389
        %v979 = vunpack.c.h.b16 %v389
        %v980 = vunpack.c.l.b16 %v390
        %v981 = vunpack.c.h.b16 %v390
        %v982 = vunpack.c.l.b16 %v391
        %v983 = vunpack.c.h.b16 %v391
        %v984 = vunpack.c.l.b16 %v392
        %v985 = vunpack.c.h.b16 %v392
        %v986 = vunpack.c.l.b16 %v393
        %v987 = vunpack.c.h.b16 %v393
        %v988 = vunpack.c.l.b16 %v394
        %v989 = vunpack.c.h.b16 %v394
        %v990 = vunpack.c.l.b16 %v395
        %v991 = vunpack.c.h.b16 %v395
        %v992 = vunpack.c.l.b16 %v396
        %v993 = vunpack.c.h.b16 %v396
        %v994 = vunpack.c.l.b16 %v397
        %v995 = vunpack.c.h.b16 %v397
        %v996 = vunpack.c.l.b16 %v398
        %v997 = vunpack.c.h.b16 %v398
        %v998 = vunpack.c.l.b16 %v399
        %v999 = vunpack.c.h.b16 %v399
        %v1000 = vunpack.c.l.b16 %v400
        %v1001 = vunpack.c.h.b16 %v400
        %v1002 = vunpack.c.l.b16 %v401
        %v1003 = vunpack.c.h.b16 %v401
        %v1004 = vunpack.c.l.b16 %v402
        %v1005 = vunpack.c.h.b16 %v402
        %v1006 = vunpack.c.l.b16 %v403
        %v1007 = vunpack.c.h.b16 %v403
        %v1008 = vunpack.c.l.b16 %v404
        %v1009 = vunpack.c.h.b16 %v404
        %v1010 = vunpack.c.l.b16 %v405
        %v1011 = vunpack.c.h.b16 %v405
        %v1012 = vunpack.c.l.b16 %v406
        %v1013 = vunpack.c.h.b16 %v406
        %v1014 = vunpack.c.l.b16 %v407
        %v1015 = vunpack.c.h.b16 %v407
        %v1016 = vunpack.c.l.b16 %v408
        %v1017 = vunpack.c.h.b16 %v408
        %v1018 = vunpack.c.l.b16 %v409
        %v1019 = vunpack.c.h.b16 %v409
        %v1020 = vunpack.c.l.b16 %v410
        %v1021 = vunpack.c.h.b16 %v410
        %v1022 = vunpack.c.l.b16 %v411
        %v1023 = vunpack.c.h.b16 %v411
        %v1024 = vunpack.c.l.b16 %v412
        %v1025 = vunpack.c.h.b16 %v412
        %v1026 = vunpack.c.l.b16 %v413
        %v1027 = vunpack.c.h.b16 %v413
        %v1028 = vunpack.c.l.b16 %v414
        %v1029 = vunpack.c.h.b16 %v414
        %v1030 = vunpack.c.l.b16 %v415
        %v1031 = vunpack.c.h.b16 %v415
        %v1032 = vunpack.c.l.b16 %v416
        %v1033 = vunpack.c.h.b16 %v416
        %v1034 = vunpack.c.l.b16 %v417
        %v1035 = vunpack.c.h.b16 %v417
        %v1036 = vunpack.c.l.b16 %v418
        %v1037 = vunpack.c.h.b16 %v418
        %v1038 = vunpack.c.l.b16 %v419
        %v1039 = vunpack.c.h.b16 %v419
        %v1040 = vunpack.c.l.b16 %v420
        %v1041 = vunpack.c.h.b16 %v420
        %v1042 = vunpack.c.l.b16 %v421
        %v1043 = vunpack.c.h.b16 %v421
        %v1044 = vunpack.c.l.b16 %v422
        %v1045 = vunpack.c.h.b16 %v422
        %v1046 = vunpack.c.l.b16 %v423
        %v1047 = vunpack.c.h.b16 %v423
        %v1048 = vunpack.c.l.b16 %v424
        %v1049 = vunpack.c.h.b16 %v424
        %v1050 = vunpack.c.l.b16 %v425
        %v1051 = vunpack.c.h.b16 %v425
        %v1052 = vunpack.c.l.b16 %v426
        %v1053 = vunpack.c.h.b16 %v426
        %v1054 = vunpack.c.l.b16 %v427
        %v1055 = vunpack.c.h.b16 %v427
        %v1056 = vunpack.c.l.b16 %v428
        %v1057 = vunpack.c.h.b16 %v428
        %v1058 = vunpack.c.l.b16 %v429
        %v1059 = vunpack.c.h.b16 %v429
        %v1060 = vunpack.c.l.b16 %v430
        %v1061 = vunpack.c.h.b16 %v430
        %v1062 = vunpack.c.l.b16 %v431
        %v1063 = vunpack.c.h.b16 %v431
        %v1064 = vunpack.c.l.b16 %v432
        %v1065 = vunpack.c.h.b16 %v432
        %v1066 = vunpack.c.l.b16 %v433
        %v1067 = vunpack.c.h.b16 %v433
        %v1068 = vunpack.c.l.b16 %v434
        %v1069 = vunpack.c.h.b16 %v434
        %v1070 = vunpack.c.l.b16 %v435
        %v1071 = vunpack.c.h.b16 %v435
        %v1072 = vunpack.c.l.b16 %v436
        %v1073 = vunpack.c.h.b16 %v436
        %v1074 = vunpack.c.l.b16 %v437
        %v1075 = vunpack.c.h.b16 %v437
        %v1076 = vunpack.c.l.b16 %v438
        %v1077 = vunpack.c.h.b16 %v438
        %v1078 = vunpack.c.l.b16 %v439
        %v1079 = vunpack.c.h.b16 %v439
        %v1080 = vunpack.c.l.b16 %v440
        %v1081 = vunpack.c.h.b16 %v440
        %v1082 = vunpack.c.l.b16 %v441
        %v1083 = vunpack.c.h.b16 %v441
        %v1084 = vunpack.c.l.b16 %v442
        %v1085 = vunpack.c.h.b16 %v442
        %v1086 = vunpack.c.l.b16 %v443
        %v1087 = vunpack.c.h.b16 %v443
        %v1088 = vunpack.c.l.b16 %v444
        %v1089 = vunpack.c.h.b16 %v444
        %v1090 = vunpack.c.l.b16 %v445
        %v1091 = vunpack.c.h.b16 %v445
        %v1092 = vunpack.c.l.b16 %v446
        %v1093 = vunpack.c.h.b16 %v446
        %v1094 = vunpack.c.l.b16 %v447
        %v1095 = vunpack.c.h.b16 %v447
        %v1096 = vunpack.c.l.b16 %v448
        %v1097 = vunpack.c.h.b16 %v448
        %v1098 = vunpack.c.l.b16 %v449
        %v1099 = vunpack.c.h.b16 %v449
        %v1100 = vunpack.c.l.b16 %v450
        %v1101 = vunpack.c.h.b16 %v450
        %v1102 = vunpack.c.l.b16 %v451
        %v1103 = vunpack.c.h.b16 %v451
        %v1104 = vunpack.c.l.b16 %v452
        %v1105 = vunpack.c.h.b16 %v452
        %v1106 = vunpack.c.l.b16 %v453
        %v1107 = vunpack.c.h.b16 %v453
        %v1108 = vunpack.c.l.b16 %v454
        %v1109 = vunpack.c.h.b16 %v454
        %v1110 = vunpack.c.l.b16 %v455
        %v1111 = vunpack.c.h.b16 %v455
        %v1112 = vunpack.c.l.b16 %v456
        %v1113 = vunpack.c.h.b16 %v456
        %v1114 = vunpack.c.l.b16 %v457
        %v1115 = vunpack.c.h.b16 %v457
        %v1116 = vunpack.c.l.b16 %v458
        %v1117 = vunpack.c.h.b16 %v458
        %v1118 = vunpack.c.l.b16 %v459
        %v1119 = vunpack.c.h.b16 %v459
        %v1120 = vunpack.c.l.b16 %v460
        %v1121 = vunpack.c.h.b16 %v460
        %v1122 = vunpack.c.l.b16 %v461
        %v1123 = vunpack.c.h.b16 %v461
        %v1124 = vunpack.c.l.b16 %v462
        %v1125 = vunpack.c.h.b16 %v462
        %v1126 = vunpack.c.l.b16 %v463
        %v1127 = vunpack.c.h.b16 %v463
        %v1128 = vunpack.c.l.b16 %v464
        %v1129 = vunpack.c.h.b16 %v464
        %v1130 = vunpack.c.l.b16 %v465
        %v1131 = vunpack.c.h.b16 %v465
        %v1132 = vunpack.c.l.b16 %v466
        %v1133 = vunpack.c.h.b16 %v466
        %v1134 = vunpack.c.l.b16 %v467
        %v1135 = vunpack.c.h.b16 %v467
        %v1136 = vunpack.c.l.b16 %v468
        %v1137 = vunpack.c.h.b16 %v468
        %v1138 = vunpack.c.l.b16 %v469
        %v1139 = vunpack.c.h.b16 %v469
        %v1140 = vunpack.c.l.b16 %v470
        %v1141 = vunpack.c.h.b16 %v470
        %v1142 = vunpack.c.l.b16 %v471
        %v1143 = vunpack.c.h.b16 %v471
        %v1144 = vunpack.c.l.b16 %v472
        %v1145 = vunpack.c.h.b16 %v472
        %v1146 = vunpack.c.l.b16 %v473
        %v1147 = vunpack.c.h.b16 %v473
        %v1148 = vunpack.c.l.b16 %v474
        %v1149 = vunpack.c.h.b16 %v474
        %v1150 = vunpack.c.l.b16 %v475
        %v1151 = vunpack.c.h.b16 %v475
        %v1152 = vunpack.c.l.b16 %v476
        %v1153 = vunpack.c.h.b16 %v476
        %v1154 = vunpack.c.l.b16 %v477
        %v1155 = vunpack.c.h.b16 %v477
        %v1156 = vunpack.c.l.b16 %v478
        %v1157 = vunpack.c.h.b16 %v478
        %v1158 = vunpack.c.l.b16 %v479
        %v1159 = vunpack.c.h.b16 %v479
        %v1160 = vunpack.c.l.b16 %v480
        %v1161 = vunpack.c.h.b16 %v480
        %v1162 = vunpack.c.l.b16 %v481
        %v1163 = vunpack.c.h.b16 %v481
        %v1164 = vunpack.c.l.b16 %v482
        %v1165 = vunpack.c.h.b16 %v482
        %v1166 = vunpack.c.l.b16 %v483
        %v1167 = vunpack.c.h.b16 %v483
        %v1168 = vunpack.c.l.b16 %v484
        %v1169 = vunpack.c.h.b16 %v484
        %v1170 = vunpack.c.l.b16 %v485
        %v1171 = vunpack.c.h.b16 %v485
        %v1172 = vunpack.c.l.b16 %v486
        %v1173 = vunpack.c.h.b16 %v486
        %v1174 = vunpack.c.l.b16 %v487
        %v1175 = vunpack.c.h.b16 %v487
        %v1176 = vunpack.c.l.b16 %v488
        %v1177 = vunpack.c.h.b16 %v488
        %v1178 = vunpack.c.l.b16 %v489
        %v1179 = vunpack.c.h.b16 %v489
        %v1180 = vunpack.c.l.b16 %v490
        %v1181 = vunpack.c.h.b16 %v490
        %v1182 = vunpack.c.l.b16 %v491
        %v1183 = vunpack.c.h.b16 %v491
        %v1184 = vunpack.c.l.b16 %v492
        %v1185 = vunpack.c.h.b16 %v492
        %v1186 = vunpack.c.l.b16 %v493
        %v1187 = vunpack.c.h.b16 %v493
        %v1188 = vunpack.c.l.b16 %v494
        %v1189 = vunpack.c.h.b16 %v494
        %v1190 = vunpack.c.l.b16 %v495
        %v1191 = vunpack.c.h.b16 %v495
        %v1192 = vunpack.c.l.b16 %v496
        %v1193 = vunpack.c.h.b16 %v496
        %v1194 = vunpack.c.l.b16 %v497
        %v1195 = vunpack.c.h.b16 %v497
        %v1196 = vunpack.c.l.b16 %v498
        %v1197 = vunpack.c.h.b16 %v498
        %v1198 = vunpack.c.l.b16 %v499
        %v1199 = vunpack.c.h.b16 %v499
        %v1200 = vunpack.c.l.b16 %v500
        %v1201 = vunpack.c.h.b16 %v500
        %v1202 = vunpack.c.l.b16 %v501
        %v1203 = vunpack.c.h.b16 %v501
        %v1204 = vunpack.c.l.b16 %v502
        %v1205 = vunpack.c.h.b16 %v502
        %v1206 = vunpack.c.l.b16 %v503
        %v1207 = vunpack.c.h.b16 %v503
        %v1208 = vunpack.c.l.b16 %v504
        %v1209 = vunpack.c.h.b16 %v504
        %v1210 = vunpack.c.l.b16 %v505
        %v1211 = vunpack.c.h.b16 %v505
        %v1212 = vunpack.c.l.b16 %v506
        %v1213 = vunpack.c.h.b16 %v506
        %v1214 = vunpack.c.l.b16 %v507
        %v1215 = vunpack.c.h.b16 %v507
        %v1216 = vunpack.c.l.b16 %v508
        %v1217 = vunpack.c.h.b16 %v508
        %v1218 = vunpack.c.l.b16 %v509
        %v1219 = vunpack.c.h.b16 %v509
        %v1220 = vunpack.c.l.b16 %v510
        %v1221 = vunpack.c.h.b16 %v510
        %v1222 = vunpack.c.l.b16 %v511
        %v1223 = vunpack.c.h.b16 %v511
        %v1224 = vunpack.c.l.b16 %v512
        %v1225 = vunpack.c.h.b16 %v512
        %v1226 = vunpack.c.l.b16 %v513
        %v1227 = vunpack.c.h.b16 %v513
        %v1228 = vunpack.c.l.b16 %v514
        %v1229 = vunpack.c.h.b16 %v514
        %v1230 = vunpack.c.l.b16 %v515
        %v1231 = vunpack.c.h.b16 %v515
        %v1232 = vunpack.c.l.b16 %v516
        %v1233 = vunpack.c.h.b16 %v516
        %v1234 = vunpack.c.l.b16 %v517
        %v1235 = vunpack.c.h.b16 %v517
        %v1236 = vunpack.c.l.b16 %v518
        %v1237 = vunpack.c.h.b16 %v518
        %v1238 = vunpack.c.l.b16 %v519
        %v1239 = vunpack.c.h.b16 %v519
        %v1240 = vunpack.c.l.b16 %v520
        %v1241 = vunpack.c.h.b16 %v520
        %v1242 = vunpack.c.l.b16 %v521
        %v1243 = vunpack.c.h.b16 %v521
        %v1244 = vunpack.c.l.b16 %v522
        %v1245 = vunpack.c.h.b16 %v522
        %v1246 = vunpack.c.l.b16 %v523
        %v1247 = vunpack.c.h.b16 %v523
        %v1248 = vunpack.c.l.b16 %v524
        %v1249 = vunpack.c.h.b16 %v524
        %v1250 = vunpack.c.l.b16 %v525
        %v1251 = vunpack.c.h.b16 %v525
        %v1252 = vunpack.c.l.b16 %v526
        %v1253 = vunpack.c.h.b16 %v526
        %v1254 = vunpack.c.l.b16 %v527
        %v1255 = vunpack.c.h.b16 %v527
        %v1256 = vunpack.c.l.b16 %v528
        %v1257 = vunpack.c.h.b16 %v528
        %v1258 = vunpack.c.l.b16 %v529
        %v1259 = vunpack.c.h.b16 %v529
        %v1260 = vunpack.c.l.b16 %v530
        %v1261 = vunpack.c.h.b16 %v530
        %v1262 = vunpack.c.l.b16 %v531
        %v1263 = vunpack.c.h.b16 %v531
        %v1264 = vunpack.c.l.b16 %v532
        %v1265 = vunpack.c.h.b16 %v532
        %v1266 = vunpack.c.l.b16 %v533
        %v1267 = vunpack.c.h.b16 %v533
        %v1268 = vunpack.c.l.b16 %v534
        %v1269 = vunpack.c.h.b16 %v534
        %v1270 = vunpack.c.l.b16 %v535
        %v1271 = vunpack.c.h.b16 %v535
        %v1272 = vunpack.c.l.b16 %v536
        %v1273 = vunpack.c.h.b16 %v536
        %v1274 = vunpack.c.l.b16 %v537
        %v1275 = vunpack.c.h.b16 %v537
        %v1276 = vunpack.c.l.b16 %v538
        %v1277 = vunpack.c.h.b16 %v538
        %v1278 = vunpack.c.l.b16 %v539
        %v1279 = vunpack.c.h.b16 %v539
        %v1280 = vunpack.c.l.b16 %v540
        %v1281 = vunpack.c.h.b16 %v540
        %v1282 = vunpack.c.l.b16 %v541
        %v1283 = vunpack.c.h.b16 %v541
        %v1284 = vunpack.c.l.b16 %v542
        %v1285 = vunpack.c.h.b16 %v542
        %v1286 = vunpack.c.l.b16 %v543
        %v1287 = vunpack.c.h.b16 %v543
        %v1288 = vunpack.c.l.b16 %v544
        %v1289 = vunpack.c.h.b16 %v544
        %v1290 = vunpack.c.l.b16 %v545
        %v1291 = vunpack.c.h.b16 %v545
        %v1292 = vunpack.c.l.b16 %v546
        %v1293 = vunpack.c.h.b16 %v546
        %v1294 = vunpack.c.l.b16 %v547
        %v1295 = vunpack.c.h.b16 %v547
        %v1296 = vunpack.c.l.b16 %v548
        %v1297 = vunpack.c.h.b16 %v548
        %v1298 = vunpack.c.l.b16 %v549
        %v1299 = vunpack.c.h.b16 %v549
        %v1300 = vunpack.c.l.b16 %v550
        %v1301 = vunpack.c.h.b16 %v550
        %v1302 = vunpack.c.l.b16 %v551
        %v1303 = vunpack.c.h.b16 %v551
        %v1304 = vunpack.c.l.b16 %v552
        %v1305 = vunpack.c.h.b16 %v552
        %v1306 = vunpack.c.l.b16 %v553
        %v1307 = vunpack.c.h.b16 %v553
        %v1308 = vunpack.c.l.b16 %v554
        %v1309 = vunpack.c.h.b16 %v554
        %v1310 = vunpack.c.l.b16 %v555
        %v1311 = vunpack.c.h.b16 %v555
        %v1312 = vunpack.c.l.b16 %v556
        %v1313 = vunpack.c.h.b16 %v556
        %v1314 = vunpack.c.l.b16 %v557
        %v1315 = vunpack.c.h.b16 %v557
        %v1316 = vunpack.c.l.b16 %v558
        %v1317 = vunpack.c.h.b16 %v558
        %v1318 = vunpack.c.l.b16 %v559
        %v1319 = vunpack.c.h.b16 %v559
        %v1320 = vunpack.c.l.b16 %v560
        %v1321 = vunpack.c.h.b16 %v560
        %v1322 = vunpack.c.l.b16 %v561
        %v1323 = vunpack.c.h.b16 %v561
        %v1324 = vunpack.c.l.b16 %v562
        %v1325 = vunpack.c.h.b16 %v562
        %v1326 = vunpack.c.l.b16 %v563
        %v1327 = vunpack.c.h.b16 %v563
        %v1328 = vunpack.c.l.b16 %v564
        %v1329 = vunpack.c.h.b16 %v564
        %v1330 = vunpack.c.l.b16 %v565
        %v1331 = vunpack.c.h.b16 %v565
        %v1332 = vunpack.c.l.b16 %v566
        %v1333 = vunpack.c.h.b16 %v566
        %v1334 = vunpack.c.l.b16 %v567
        %v1335 = vunpack.c.h.b16 %v567
        %v1336 = vpack.c.b16 %v828, %v824
        %v1337 = vpack.c.b16 %v829, %v825
        %v1338 = vpack.c.b16 %v830, %v826
        %v1339 = vpack.c.b16 %v831, %v827
        %v1340 = vpack.c.b16 %v836, %v832
        %v1341 = vpack.c.b16 %v837, %v833
        %v1342 = vpack.c.b16 %v838, %v834
        %v1343 = vpack.c.b16 %v839, %v835
        %v1344 = vpack.c.b16 %v844, %v840
        %v1345 = vpack.c.b16 %v845, %v841
        %v1346 = vpack.c.b16 %v846, %v842
        %v1347 = vpack.c.b16 %v847, %v843
        %v1348 = vpack.c.b16 %v852, %v848
        %v1349 = vpack.c.b16 %v853, %v849
        %v1350 = vpack.c.b16 %v854, %v850
        %v1351 = vpack.c.b16 %v855, %v851
        %v1352 = vpack.c.b16 %v860, %v856
        %v1353 = vpack.c.b16 %v861, %v857
        %v1354 = vpack.c.b16 %v862, %v858
        %v1355 = vpack.c.b16 %v863, %v859
        %v1356 = vpack.c.b16 %v868, %v864
        %v1357 = vpack.c.b16 %v869, %v865
        %v1358 = vpack.c.b16 %v870, %v866
        %v1359 = vpack.c.b16 %v871, %v867
        %v1360 = vpack.c.b16 %v876, %v872
        %v1361 = vpack.c.b16 %v877, %v873
        %v1362 = vpack.c.b16 %v878, %v874
        %v1363 = vpack.c.b16 %v879, %v875
        %v1364 = vpack.c.b16 %v884, %v880
        %v1365 = vpack.c.b16 %v885, %v881
        %v1366 = vpack.c.b16 %v886, %v882
        %v1367 = vpack.c.b16 %v887, %v883
        %v1368 = vpack.c.b16 %v892, %v888
        %v1369 = vpack.c.b16 %v893, %v889
        %v1370 = vpack.c.b16 %v894, %v890
        %v1371 = vpack.c.b16 %v895, %v891
        %v1372 = vpack.c.b16 %v900, %v896
        %v1373 = vpack.c.b16 %v901, %v897
        %v1374 = vpack.c.b16 %v902, %v898
        %v1375 = vpack.c.b16 %v903, %v899
        %v1376 = vpack.c.b16 %v908, %v904
        %v1377 = vpack.c.b16 %v909, %v905
        %v1378 = vpack.c.b16 %v910, %v906
        %v1379 = vpack.c.b16 %v911, %v907
        %v1380 = vpack.c.b16 %v916, %v912
        %v1381 = vpack.c.b16 %v917, %v913
        %v1382 = vpack.c.b16 %v918, %v914
        %v1383 = vpack.c.b16 %v919, %v915
        %v1384 = vpack.c.b16 %v924, %v920
        %v1385 = vpack.c.b16 %v925, %v921
        %v1386 = vpack.c.b16 %v926, %v922
        %v1387 = vpack.c.b16 %v927, %v923
        %v1388 = vpack.c.b16 %v932, %v928
        %v1389 = vpack.c.b16 %v933, %v929
        %v1390 = vpack.c.b16 %v934, %v930
        %v1391 = vpack.c.b16 %v935, %v931
        %v1392 = vpack.c.b16 %v940, %v936
        %v1393 = vpack.c.b16 %v941, %v937
        %v1394 = vpack.c.b16 %v942, %v938
        %v1395 = vpack.c.b16 %v943, %v939
        %v1396 = vpack.c.b16 %v948, %v944
        %v1397 = vpack.c.b16 %v949, %v945
        %v1398 = vpack.c.b16 %v950, %v946
        %v1399 = vpack.c.b16 %v951, %v947
        %v1400 = vpack.c.b16 %v956, %v952
        %v1401 = vpack.c.b16 %v957, %v953
        %v1402 = vpack.c.b16 %v958, %v954
        %v1403 = vpack.c.b16 %v959, %v955
        %v1404 = vpack.c.b16 %v964, %v960
        %v1405 = vpack.c.b16 %v965, %v961
        %v1406 = vpack.c.b16 %v966, %v962
        %v1407 = vpack.c.b16 %v967, %v963
        %v1408 = vpack.c.b16 %v972, %v968
        %v1409 = vpack.c.b16 %v973, %v969
        %v1410 = vpack.c.b16 %v974, %v970
        %v1411 = vpack.c.b16 %v975, %v971
        %v1412 = vpack.c.b16 %v980, %v976
        %v1413 = vpack.c.b16 %v981, %v977
        %v1414 = vpack.c.b16 %v982, %v978
        %v1415 = vpack.c.b16 %v983, %v979
        %v1416 = vpack.c.b16 %v988, %v984
        %v1417 = vpack.c.b16 %v989, %v985
        %v1418 = vpack.c.b16 %v990, %v986
        %v1419 = vpack.c.b16 %v991, %v987
        %v1420 = vpack.c.b16 %v996, %v992
        %v1421 = vpack.c.b16 %v997, %v993
        %v1422 = vpack.c.b16 %v998, %v994
        %v1423 = vpack.c.b16 %v999, %v995
        %v1424 = vpack.c.b16 %v1004, %v1000
        %v1425 = vpack.c.b16 %v1005, %v1001
        %v1426 = vpack.c.b16 %v1006, %v1002
        %v1427 = vpack.c.b16 %v1007, %v1003
        %v1428 = vpack.c.b16 %v1012, %v1008
        %v1429 = vpack.c.b16 %v1013, %v1009
        %v1430 = vpack.c.b16 %v1014, %v1010
        %v1431 = vpack.c.b16 %v1015, %v1011
        %v1432 = vpack.c.b16 %v1020, %v1016
        %v1433 = vpack.c.b16 %v1021, %v1017
        %v1434 = vpack.c.b16 %v1022, %v1018
        %v1435 = vpack.c.b16 %v1023, %v1019
        %v1436 = vpack.c.b16 %v1028, %v1024
        %v1437 = vpack.c.b16 %v1029, %v1025
        %v1438 = vpack.c.b16 %v1030, %v1026
        %v1439 = vpack.c.b16 %v1031, %v1027
        %v1440 = vpack.c.b16 %v1036, %v1032
        %v1441 = vpack.c.b16 %v1037, %v1033
        %v1442 = vpack.c.b16 %v1038, %v1034
        %v1443 = vpack.c.b16 %v1039, %v1035
        %v1444 = vpack.c.b16 %v1044, %v1040
        %v1445 = vpack.c.b16 %v1045, %v1041
        %v1446 = vpack.c.b16 %v1046, %v1042
        %v1447 = vpack.c.b16 %v1047, %v1043
        %v1448 = vpack.c.b16 %v1052, %v1048
        %v1449 = vpack.c.b16 %v1053, %v1049
        %v1450 = vpack.c.b16 %v1054, %v1050
        %v1451 = vpack.c.b16 %v1055, %v1051
        %v1452 = vpack.c.b16 %v1060, %v1056
        %v1453 = vpack.c.b16 %v1061, %v1057
        %v1454 = vpack.c.b16 %v1062, %v1058
        %v1455 = vpack.c.b16 %v1063, %v1059
        %v1456 = vpack.c.b16 %v1068, %v1064
        %v1457 = vpack.c.b16 %v1069, %v1065
        %v1458 = vpack.c.b16 %v1070, %v1066
        %v1459 = vpack.c.b16 %v1071, %v1067
        %v1460 = vpack.c.b16 %v1076, %v1072
        %v1461 = vpack.c.b16 %v1077, %v1073
        %v1462 = vpack.c.b16 %v1078, %v1074
        %v1463 = vpack.c.b16 %v1079, %v1075
        %v1464 = vpack.c.b16 %v1084, %v1080
        %v1465 = vpack.c.b16 %v1085, %v1081
        %v1466 = vpack.c.b16 %v1086, %v1082
        %v1467 = vpack.c.b16 %v1087, %v1083
        %v1468 = vpack.c.b16 %v1092, %v1088
        %v1469 = vpack.c.b16 %v1093, %v1089
        %v1470 = vpack.c.b16 %v1094, %v1090
        %v1471 = vpack.c.b16 %v1095, %v1091
        %v1472 = vpack.c.b16 %v1100, %v1096
        %v1473 = vpack.c.b16 %v1101, %v1097
        %v1474 = vpack.c.b16 %v1102, %v1098
        %v1475 = vpack.c.b16 %v1103, %v1099
        %v1476 = vpack.c.b16 %v1108, %v1104
        %v1477 = vpack.c.b16 %v1109, %v1105
        %v1478 = vpack.c.b16 %v1110, %v1106
        %v1479 = vpack.c.b16 %v1111, %v1107
        %v1480 = vpack.c.b16 %v1116, %v1112
        %v1481 = vpack.c.b16 %v1117, %v1113
        %v1482 = vpack.c.b16 %v1118, %v1114
        %v1483 = vpack.c.b16 %v1119, %v1115
        %v1484 = vpack.c.b16 %v1124, %v1120
        %v1485 = vpack.c.b16 %v1125, %v1121
        %v1486 = vpack.c.b16 %v1126, %v1122
        %v1487 = vpack.c.b16 %v1127, %v1123
        %v1488 = vpack.c.b16 %v1132, %v1128
        %v1489 = vpack.c.b16 %v1133, %v1129
        %v1490 = vpack.c.b16 %v1134, %v1130
        %v1491 = vpack.c.b16 %v1135, %v1131
        %v1492 = vpack.c.b16 %v1140, %v1136
        %v1493 = vpack.c.b16 %v1141, %v1137
        %v1494 = vpack.c.b16 %v1142, %v1138
        %v1495 = vpack.c.b16 %v1143, %v1139
        %v1496 = vpack.c.b16 %v1148, %v1144
        %v1497 = vpack.c.b16 %v1149, %v1145
        %v1498 = vpack.c.b16 %v1150, %v1146
        %v1499 = vpack.c.b16 %v1151, %v1147
        %v1500 = vpack.c.b16 %v1156, %v1152
        %v1501 = vpack.c.b16 %v1157, %v1153
        %v1502 = vpack.c.b16 %v1158, %v1154
        %v1503 = vpack.c.b16 %v1159, %v1155
        %v1504 = vpack.c.b16 %v1164, %v1160
        %v1505 = vpack.c.b16 %v1165, %v1161
        %v1506 = vpack.c.b16 %v1166, %v1162
        %v1507 = vpack.c.b16 %v1167, %v1163
        %v1508 = vpack.c.b16 %v1172, %v1168
        %v1509 = vpack.c.b16 %v1173, %v1169
        %v1510 = vpack.c.b16 %v1174, %v1170
        %v1511 = vpack.c.b16 %v1175, %v1171
        %v1512 = vpack.c.b16 %v1180, %v1176
        %v1513 = vpack.c.b16 %v1181, %v1177
        %v1514 = vpack.c.b16 %v1182, %v1178
        %v1515 = vpack.c.b16 %v1183, %v1179
        %v1516 = vpack.c.b16 %v1188, %v1184
        %v1517 = vpack.c.b16 %v1189, %v1185
        %v1518 = vpack.c.b16 %v1190, %v1186
        %v1519 = vpack.c.b16 %v1191, %v1187
        %v1520 = vpack.c.b16 %v1196, %v1192
        %v1521 = vpack.c.b16 %v1197, %v1193
        %v1522 = vpack.c.b16 %v1198, %v1194
        %v1523 = vpack.c.b16 %v1199, %v1195
        %v1524 = vpack.c.b16 %v1204, %v1200
        %v1525 = vpack.c.b16 %v1205, %v1201
        %v1526 = vpack.c.b16 %v1206, %v1202
        %v1527 = vpack.c.b16 %v1207, %v1203
        %v1528 = vpack.c.b16 %v1212, %v1208
        %v1529 = vpack.c.b16 %v1213, %v1209
        %v1530 = vpack.c.b16 %v1214, %v1210
        %v1531 = vpack.c.b16 %v1215, %v1211
        %v1532 = vpack.c.b16 %v1220, %v1216
        %v1533 = vpack.c.b16 %v1221, %v1217
        %v1534 = vpack.c.b16 %v1222, %v1218
        %v1535 = vpack.c.b16 %v1223, %v1219
        %v1536 = vpack.c.b16 %v1228, %v1224
        %v1537 = vpack.c.b16 %v1229, %v1225
        %v1538 = vpack.c.b16 %v1230, %v1226
        %v1539 = vpack.c.b16 %v1231, %v1227
        %v1540 = vpack.c.b16 %v1236, %v1232
        %v1541 = vpack.c.b16 %v1237, %v1233
        %v1542 = vpack.c.b16 %v1238, %v1234
        %v1543 = vpack.c.b16 %v1239, %v1235
        %v1544 = vpack.c.b16 %v1244, %v1240
        %v1545 = vpack.c.b16 %v1245, %v1241
        %v1546 = vpack.c.b16 %v1246, %v1242
        %v1547 = vpack.c.b16 %v1247, %v1243
        %v1548 = vpack.c.b16 %v1252, %v1248
        %v1549 = vpack.c.b16 %v1253, %v1249
        %v1550 = vpack.c.b16 %v1254, %v1250
        %v1551 = vpack.c.b16 %v1255, %v1251
        %v1552 = vpack.c.b16 %v1260, %v1256
        %v1553 = vpack.c.b16 %v1261, %v1257
        %v1554 = vpack.c.b16 %v1262, %v1258
        %v1555 = vpack.c.b16 %v1263, %v1259
        %v1556 = vpack.c.b16 %v1268, %v1264
        %v1557 = vpack.c.b16 %v1269, %v1265
        %v1558 = vpack.c.b16 %v1270, %v1266
        %v1559 = vpack.c.b16 %v1271, %v1267
        %v1560 = vpack.c.b16 %v1276, %v1272
        %v1561 = vpack.c.b16 %v1277, %v1273
        %v1562 = vpack.c.b16 %v1278, %v1274
        %v1563 = vpack.c.b16 %v1279, %v1275
        %v1564 = vpack.c.b16 %v1284, %v1280
        %v1565 = vpack.c.b16 %v1285, %v1281
        %v1566 = vpack.c.b16 %v1286, %v1282
        %v1567 = vpack.c.b16 %v1287, %v1283
        %v1568 = vpack.c.b16 %v1292, %v1288
        %v1569 = vpack.c.b16 %v1293, %v1289
        %v1570 = vpack.c.b16 %v1294, %v1290
        %v1571 = vpack.c.b16 %v1295, %v1291
        %v1572 = vpack.c.b16 %v1300, %v1296
        %v1573 = vpack.c.b16 %v1301, %v1297
        %v1574 = vpack.c.b16 %v1302, %v1298
        %v1575 = vpack.c.b16 %v1303, %v1299
        %v1576 = vpack.c.b16 %v1308, %v1304
        %v1577 = vpack.c.b16 %v1309, %v1305
        %v1578 = vpack.c.b16 %v1310, %v1306
        %v1579 = vpack.c.b16 %v1311, %v1307
        %v1580 = vpack.c.b16 %v1316, %v1312
        %v1581 = vpack.c.b16 %v1317, %v1313
        %v1582 = vpack.c.b16 %v1318, %v1314
        %v1583 = vpack.c.b16 %v1319, %v1315
        %v1584 = vpack.c.b16 %v1324, %v1320
        %v1585 = vpack.c.b16 %v1325, %v1321
        %v1586 = vpack.c.b16 %v1326, %v1322
        %v1587 = vpack.c.b16 %v1327, %v1323
        %v1588 = vpack.c.b16 %v1332, %v1328
        %v1589 = vpack.c.b16 %v1333, %v1329
        %v1590 = vpack.c.b16 %v1334, %v1330
        %v1591 = vpack.c.b16 %v1335, %v1331
        %1848 = vmatprep.subr.bf16.mxu0 %v1365
        %1849 = vmatpush1.bf16.msra.mxu0 %v1364
        %1850 = vmatprep.subr.bf16.mxu0 %v1361
        %1851 = vmatpush1.bf16.msra.mxu0 %v1360
        %1852 = vmatprep.subr.bf16.mxu0 %v1357
        %1853 = vmatpush1.bf16.msra.mxu0 %v1356
        %1854 = vmatprep.subr.bf16.mxu0 %v1353
        %1855 = vmatpush1.bf16.msra.mxu0 %v1352
        %1856 = vmatprep.subr.bf16.mxu0 %v1349
        %1857 = vmatpush1.bf16.msra.mxu0 %v1348
        %1858 = vmatprep.subr.bf16.mxu0 %v1345
        %1859 = vmatpush1.bf16.msra.mxu0 %v1344
        %1860 = vmatprep.subr.bf16.mxu0 %v1341
        %1861 = vmatpush1.bf16.msra.mxu0 %v1340
        %1862 = vmatprep.subr.bf16.mxu0 %v1337
        %1863 = vmatpush1.bf16.msra.mxu0 %v1336
        %1864 = vmatprep.subr.bf16.mxu0 %v1397
        %1865 = vmatpush2.bf16.msra.mxu0 %v1396
        %1866 = vmatprep.subr.bf16.mxu0 %v1393
        %1867 = vmatpush2.bf16.msra.mxu0 %v1392
        %1868 = vmatprep.subr.bf16.mxu0 %v1389
        %1869 = vmatpush2.bf16.msra.mxu0 %v1388
        %1870 = vmatprep.subr.bf16.mxu0 %v1385
        %1871 = vmatpush2.bf16.msra.mxu0 %v1384
        %1872 = vmatprep.subr.bf16.mxu0 %v1381
        %1873 = vmatpush2.bf16.msra.mxu0 %v1380
        %1874 = vmatprep.subr.bf16.mxu0 %v1377
        %1875 = vmatpush2.bf16.msra.mxu0 %v1376
        %1876 = vmatprep.subr.bf16.mxu0 %v1373
        %1877 = vmatpush2.bf16.msra.mxu0 %v1372
        %1878 = vmatprep.subr.bf16.mxu0 %v1369
        %1879 = vmatpush2.bf16.msra.mxu0 %v1368
        %1880 = vmatprep.mubr.bf16.mxu0 %v305
        %1881 = vmatmul.mubr.bf16.gmra.mxu0 %v304
        %v1882 = vpop.f32.mrf.mxu0
        %v1883 = vadd.f32 0.0, %v1882
        %v1884 = vpop.f32.mrf.mxu0
        %v1885 = vadd.f32 0.0, %v1884
        %v1886 = vpop.f32.mrf.mxu0
        %v1887 = vpop.f32.mrf.mxu0
        %1888 = vdwg.mxu0
        %1889 = vmatprep.subr.bf16.mxu0 %v1429
        %1890 = vmatpush1.bf16.msra.mxu0 %v1428
        %1891 = vmatprep.subr.bf16.mxu0 %v1425
        %1892 = vmatpush1.bf16.msra.mxu0 %v1424
        %1893 = vmatprep.subr.bf16.mxu0 %v1421
        %1894 = vmatpush1.bf16.msra.mxu0 %v1420
        %1895 = vmatprep.subr.bf16.mxu0 %v1417
        %1896 = vmatpush1.bf16.msra.mxu0 %v1416
        %1897 = vmatprep.subr.bf16.mxu0 %v1413
        %1898 = vmatpush1.bf16.msra.mxu0 %v1412
        %1899 = vmatprep.subr.bf16.mxu0 %v1409
        %1900 = vmatpush1.bf16.msra.mxu0 %v1408
        %1901 = vmatprep.subr.bf16.mxu0 %v1405
        %1902 = vmatpush1.bf16.msra.mxu0 %v1404
        %1903 = vmatprep.subr.bf16.mxu0 %v1401
        %1904 = vmatpush1.bf16.msra.mxu0 %v1400
        %1905 = vmatprep.subr.bf16.mxu0 %v1461
        %1906 = vmatpush2.bf16.msra.mxu0 %v1460
        %1907 = vmatprep.subr.bf16.mxu0 %v1457
        %1908 = vmatpush2.bf16.msra.mxu0 %v1456
        %1909 = vmatprep.subr.bf16.mxu0 %v1453
        %1910 = vmatpush2.bf16.msra.mxu0 %v1452
        %1911 = vmatprep.subr.bf16.mxu0 %v1449
        %1912 = vmatpush2.bf16.msra.mxu0 %v1448
        %1913 = vmatprep.subr.bf16.mxu0 %v1445
        %1914 = vmatpush2.bf16.msra.mxu0 %v1444
        %1915 = vmatprep.subr.bf16.mxu0 %v1441
        %1916 = vmatpush2.bf16.msra.mxu0 %v1440
        %1917 = vmatprep.subr.bf16.mxu0 %v1437
        %1918 = vmatpush2.bf16.msra.mxu0 %v1436
        %1919 = vmatprep.subr.bf16.mxu0 %v1433
        %1920 = vmatpush2.bf16.msra.mxu0 %v1432
        %1921 = vmatprep.mubr.bf16.mxu0 %v307
        %1922 = vmatmul.mubr.bf16.gmra.mxu0 %v306
        %v1923 = vpop.f32.mrf.mxu0
        %v1924 = vadd.f32 %v1883, %v1923
        %v1925 = vpop.f32.mrf.mxu0
        %v1926 = vadd.f32 %v1885, %v1925
        %v1927 = vpop.f32.mrf.mxu0
        %v1928 = vpop.f32.mrf.mxu0
        %1929 = vdwg.mxu0
        %1930 = vmatprep.subr.bf16.mxu0 %v1493
        %1931 = vmatpush1.bf16.msra.mxu0 %v1492
        %1932 = vmatprep.subr.bf16.mxu0 %v1489
        %1933 = vmatpush1.bf16.msra.mxu0 %v1488
        %1934 = vmatprep.subr.bf16.mxu0 %v1485
        %1935 = vmatpush1.bf16.msra.mxu0 %v1484
        %1936 = vmatprep.subr.bf16.mxu0 %v1481
        %1937 = vmatpush1.bf16.msra.mxu0 %v1480
        %1938 = vmatprep.subr.bf16.mxu0 %v1477
        %1939 = vmatpush1.bf16.msra.mxu0 %v1476
        %1940 = vmatprep.subr.bf16.mxu0 %v1473
        %1941 = vmatpush1.bf16.msra.mxu0 %v1472
        %1942 = vmatprep.subr.bf16.mxu0 %v1469
        %1943 = vmatpush1.bf16.msra.mxu0 %v1468
        %1944 = vmatprep.subr.bf16.mxu0 %v1465
        %1945 = vmatpush1.bf16.msra.mxu0 %v1464
        %1946 = vmatprep.subr.bf16.mxu0 %v1525
        %1947 = vmatpush2.bf16.msra.mxu0 %v1524
        %1948 = vmatprep.subr.bf16.mxu0 %v1521
        %1949 = vmatpush2.bf16.msra.mxu0 %v1520
        %1950 = vmatprep.subr.bf16.mxu0 %v1517
        %1951 = vmatpush2.bf16.msra.mxu0 %v1516
        %1952 = vmatprep.subr.bf16.mxu0 %v1513
        %1953 = vmatpush2.bf16.msra.mxu0 %v1512
        %1954 = vmatprep.subr.bf16.mxu0 %v1509
        %1955 = vmatpush2.bf16.msra.mxu0 %v1508
        %1956 = vmatprep.subr.bf16.mxu0 %v1505
        %1957 = vmatpush2.bf16.msra.mxu0 %v1504
        %1958 = vmatprep.subr.bf16.mxu0 %v1501
        %1959 = vmatpush2.bf16.msra.mxu0 %v1500
        %1960 = vmatprep.subr.bf16.mxu0 %v1497
        %1961 = vmatpush2.bf16.msra.mxu0 %v1496
        %1962 = vmatprep.mubr.bf16.mxu0 %v309
        %1963 = vmatmul.mubr.bf16.gmra.mxu0 %v308
        %v1964 = vpop.f32.mrf.mxu0
        %v1965 = vadd.f32 %v1924, %v1964
        %v1966 = vpop.f32.mrf.mxu0
        %v1967 = vadd.f32 %v1926, %v1966
        %v1968 = vpop.f32.mrf.mxu0
        %v1969 = vpop.f32.mrf.mxu0
        %1970 = vdwg.mxu0
        %1971 = vmatprep.subr.bf16.mxu0 %v1557
        %1972 = vmatpush1.bf16.msra.mxu0 %v1556
        %1973 = vmatprep.subr.bf16.mxu0 %v1553
        %1974 = vmatpush1.bf16.msra.mxu0 %v1552
        %1975 = vmatprep.subr.bf16.mxu0 %v1549
        %1976 = vmatpush1.bf16.msra.mxu0 %v1548
        %1977 = vmatprep.subr.bf16.mxu0 %v1545
        %1978 = vmatpush1.bf16.msra.mxu0 %v1544
        %1979 = vmatprep.subr.bf16.mxu0 %v1541
        %1980 = vmatpush1.bf16.msra.mxu0 %v1540
        %1981 = vmatprep.subr.bf16.mxu0 %v1537
        %1982 = vmatpush1.bf16.msra.mxu0 %v1536
        %1983 = vmatprep.subr.bf16.mxu0 %v1533
        %1984 = vmatpush1.bf16.msra.mxu0 %v1532
        %1985 = vmatprep.subr.bf16.mxu0 %v1529
        %1986 = vmatpush1.bf16.msra.mxu0 %v1528
        %1987 = vmatprep.subr.bf16.mxu0 %v1589
        %1988 = vmatpush2.bf16.msra.mxu0 %v1588
        %1989 = vmatprep.subr.bf16.mxu0 %v1585
        %1990 = vmatpush2.bf16.msra.mxu0 %v1584
        %1991 = vmatprep.subr.bf16.mxu0 %v1581
        %1992 = vmatpush2.bf16.msra.mxu0 %v1580
        %1993 = vmatprep.subr.bf16.mxu0 %v1577
        %1994 = vmatpush2.bf16.msra.mxu0 %v1576
        %1995 = vmatprep.subr.bf16.mxu0 %v1573
        %1996 = vmatpush2.bf16.msra.mxu0 %v1572
        %1997 = vmatprep.subr.bf16.mxu0 %v1569
        %1998 = vmatpush2.bf16.msra.mxu0 %v1568
        %1999 = vmatprep.subr.bf16.mxu0 %v1565
        %2000 = vmatpush2.bf16.msra.mxu0 %v1564
        %2001 = vmatprep.subr.bf16.mxu0 %v1561
        %2002 = vmatpush2.bf16.msra.mxu0 %v1560
        %2003 = vmatprep.mubr.bf16.mxu0 %v311
        %2004 = vmatmul.mubr.bf16.gmra.mxu0 %v310
        %v2005 = vpop.f32.mrf.mxu0
        %v2006 = vadd.f32 %v1965, %v2005
        %v2007 = vpop.f32.mrf.mxu0
        %v2008 = vadd.f32 %v1967, %v2007
        %v2009 = vpop.f32.mrf.mxu0
        %v2010 = vpop.f32.mrf.mxu0
        %2011 = vdwg.mxu0
        %2012 = vmatprep.subr.bf16.mxu0 %v1367
        %2013 = vmatpush1.bf16.msra.mxu0 %v1366
        %2014 = vmatprep.subr.bf16.mxu0 %v1363
        %2015 = vmatpush1.bf16.msra.mxu0 %v1362
        %2016 = vmatprep.subr.bf16.mxu0 %v1359
        %2017 = vmatpush1.bf16.msra.mxu0 %v1358
        %2018 = vmatprep.subr.bf16.mxu0 %v1355
        %2019 = vmatpush1.bf16.msra.mxu0 %v1354
        %2020 = vmatprep.subr.bf16.mxu0 %v1351
        %2021 = vmatpush1.bf16.msra.mxu0 %v1350
        %2022 = vmatprep.subr.bf16.mxu0 %v1347
        %2023 = vmatpush1.bf16.msra.mxu0 %v1346
        %2024 = vmatprep.subr.bf16.mxu0 %v1343
        %2025 = vmatpush1.bf16.msra.mxu0 %v1342
        %2026 = vmatprep.subr.bf16.mxu0 %v1339
        %2027 = vmatpush1.bf16.msra.mxu0 %v1338
        %2028 = vmatprep.subr.bf16.mxu0 %v1399
        %2029 = vmatpush2.bf16.msra.mxu0 %v1398
        %2030 = vmatprep.subr.bf16.mxu0 %v1395
        %2031 = vmatpush2.bf16.msra.mxu0 %v1394
        %2032 = vmatprep.subr.bf16.mxu0 %v1391
        %2033 = vmatpush2.bf16.msra.mxu0 %v1390
        %2034 = vmatprep.subr.bf16.mxu0 %v1387
        %2035 = vmatpush2.bf16.msra.mxu0 %v1386
        %2036 = vmatprep.subr.bf16.mxu0 %v1383
        %2037 = vmatpush2.bf16.msra.mxu0 %v1382
        %2038 = vmatprep.subr.bf16.mxu0 %v1379
        %2039 = vmatpush2.bf16.msra.mxu0 %v1378
        %2040 = vmatprep.subr.bf16.mxu0 %v1375
        %2041 = vmatpush2.bf16.msra.mxu0 %v1374
        %2042 = vmatprep.subr.bf16.mxu0 %v1371
        %2043 = vmatpush2.bf16.msra.mxu0 %v1370
        %2044 = vmatprep.mubr.bf16.mxu0 %v305
        %2045 = vmatmul.mubr.bf16.gmra.mxu0 %v304
        %v2046 = vpop.f32.mrf.mxu0
        %v2047 = vadd.f32 0.0, %v2046
        %v2048 = vpop.f32.mrf.mxu0
        %v2049 = vadd.f32 0.0, %v2048
        %v2050 = vpop.f32.mrf.mxu0
        %v2051 = vpop.f32.mrf.mxu0
        %2052 = vdwg.mxu0
        %2053 = vmatprep.subr.bf16.mxu0 %v1431
        %2054 = vmatpush1.bf16.msra.mxu0 %v1430
        %2055 = vmatprep.subr.bf16.mxu0 %v1427
        %2056 = vmatpush1.bf16.msra.mxu0 %v1426
        %2057 = vmatprep.subr.bf16.mxu0 %v1423
        %2058 = vmatpush1.bf16.msra.mxu0 %v1422
        %2059 = vmatprep.subr.bf16.mxu0 %v1419
        %2060 = vmatpush1.bf16.msra.mxu0 %v1418
        %2061 = vmatprep.subr.bf16.mxu0 %v1415
        %2062 = vmatpush1.bf16.msra.mxu0 %v1414
        %2063 = vmatprep.subr.bf16.mxu0 %v1411
        %2064 = vmatpush1.bf16.msra.mxu0 %v1410
        %2065 = vmatprep.subr.bf16.mxu0 %v1407
        %2066 = vmatpush1.bf16.msra.mxu0 %v1406
        %2067 = vmatprep.subr.bf16.mxu0 %v1403
        %2068 = vmatpush1.bf16.msra.mxu0 %v1402
        %2069 = vmatprep.subr.bf16.mxu0 %v1463
        %2070 = vmatpush2.bf16.msra.mxu0 %v1462
        %2071 = vmatprep.subr.bf16.mxu0 %v1459
        %2072 = vmatpush2.bf16.msra.mxu0 %v1458
        %2073 = vmatprep.subr.bf16.mxu0 %v1455
        %2074 = vmatpush2.bf16.msra.mxu0 %v1454
        %2075 = vmatprep.subr.bf16.mxu0 %v1451
        %2076 = vmatpush2.bf16.msra.mxu0 %v1450
        %2077 = vmatprep.subr.bf16.mxu0 %v1447
        %2078 = vmatpush2.bf16.msra.mxu0 %v1446
        %2079 = vmatprep.subr.bf16.mxu0 %v1443
        %2080 = vmatpush2.bf16.msra.mxu0 %v1442
        %2081 = vmatprep.subr.bf16.mxu0 %v1439
        %2082 = vmatpush2.bf16.msra.mxu0 %v1438
        %2083 = vmatprep.subr.bf16.mxu0 %v1435
        %2084 = vmatpush2.bf16.msra.mxu0 %v1434
        %2085 = vmatprep.mubr.bf16.mxu0 %v307
        %2086 = vmatmul.mubr.bf16.gmra.mxu0 %v306
        %v2087 = vpop.f32.mrf.mxu0
        %v2088 = vadd.f32 %v2047, %v2087
        %v2089 = vpop.f32.mrf.mxu0
        %v2090 = vadd.f32 %v2049, %v2089
        %v2091 = vpop.f32.mrf.mxu0
        %v2092 = vpop.f32.mrf.mxu0
        %2093 = vdwg.mxu0
        %2094 = vmatprep.subr.bf16.mxu0 %v1495
        %2095 = vmatpush1.bf16.msra.mxu0 %v1494
        %2096 = vmatprep.subr.bf16.mxu0 %v1491
        %2097 = vmatpush1.bf16.msra.mxu0 %v1490
        %2098 = vmatprep.subr.bf16.mxu0 %v1487
        %2099 = vmatpush1.bf16.msra.mxu0 %v1486
        %2100 = vmatprep.subr.bf16.mxu0 %v1483
        %2101 = vmatpush1.bf16.msra.mxu0 %v1482
        %2102 = vmatprep.subr.bf16.mxu0 %v1479
        %2103 = vmatpush1.bf16.msra.mxu0 %v1478
        %2104 = vmatprep.subr.bf16.mxu0 %v1475
        %2105 = vmatpush1.bf16.msra.mxu0 %v1474
        %2106 = vmatprep.subr.bf16.mxu0 %v1471
        %2107 = vmatpush1.bf16.msra.mxu0 %v1470
        %2108 = vmatprep.subr.bf16.mxu0 %v1467
        %2109 = vmatpush1.bf16.msra.mxu0 %v1466
        %2110 = vmatprep.subr.bf16.mxu0 %v1527
        %2111 = vmatpush2.bf16.msra.mxu0 %v1526
        %2112 = vmatprep.subr.bf16.mxu0 %v1523
        %2113 = vmatpush2.bf16.msra.mxu0 %v1522
        %2114 = vmatprep.subr.bf16.mxu0 %v1519
        %2115 = vmatpush2.bf16.msra.mxu0 %v1518
        %2116 = vmatprep.subr.bf16.mxu0 %v1515
        %2117 = vmatpush2.bf16.msra.mxu0 %v1514
        %2118 = vmatprep.subr.bf16.mxu0 %v1511
        %2119 = vmatpush2.bf16.msra.mxu0 %v1510
        %2120 = vmatprep.subr.bf16.mxu0 %v1507
        %2121 = vmatpush2.bf16.msra.mxu0 %v1506
        %2122 = vmatprep.subr.bf16.mxu0 %v1503
        %2123 = vmatpush2.bf16.msra.mxu0 %v1502
        %2124 = vmatprep.subr.bf16.mxu0 %v1499
        %2125 = vmatpush2.bf16.msra.mxu0 %v1498
        %2126 = vmatprep.mubr.bf16.mxu0 %v309
        %2127 = vmatmul.mubr.bf16.gmra.mxu0 %v308
        %v2128 = vpop.f32.mrf.mxu0
        %v2129 = vadd.f32 %v2088, %v2128
        %v2130 = vpop.f32.mrf.mxu0
        %v2131 = vadd.f32 %v2090, %v2130
        %v2132 = vpop.f32.mrf.mxu0
        %v2133 = vpop.f32.mrf.mxu0
        %2134 = vdwg.mxu0
        %2135 = vmatprep.subr.bf16.mxu0 %v1559
        %2136 = vmatpush1.bf16.msra.mxu0 %v1558
        %2137 = vmatprep.subr.bf16.mxu0 %v1555
        %2138 = vmatpush1.bf16.msra.mxu0 %v1554
        %2139 = vmatprep.subr.bf16.mxu0 %v1551
        %2140 = vmatpush1.bf16.msra.mxu0 %v1550
        %2141 = vmatprep.subr.bf16.mxu0 %v1547
        %2142 = vmatpush1.bf16.msra.mxu0 %v1546
        %2143 = vmatprep.subr.bf16.mxu0 %v1543
        %2144 = vmatpush1.bf16.msra.mxu0 %v1542
        %2145 = vmatprep.subr.bf16.mxu0 %v1539
        %2146 = vmatpush1.bf16.msra.mxu0 %v1538
        %2147 = vmatprep.subr.bf16.mxu0 %v1535
        %2148 = vmatpush1.bf16.msra.mxu0 %v1534
        %2149 = vmatprep.subr.bf16.mxu0 %v1531
        %2150 = vmatpush1.bf16.msra.mxu0 %v1530
        %2151 = vmatprep.subr.bf16.mxu0 %v1591
        %2152 = vmatpush2.bf16.msra.mxu0 %v1590
        %2153 = vmatprep.subr.bf16.mxu0 %v1587
        %2154 = vmatpush2.bf16.msra.mxu0 %v1586
        %2155 = vmatprep.subr.bf16.mxu0 %v1583
        %2156 = vmatpush2.bf16.msra.mxu0 %v1582
        %2157 = vmatprep.subr.bf16.mxu0 %v1579
        %2158 = vmatpush2.bf16.msra.mxu0 %v1578
        %2159 = vmatprep.subr.bf16.mxu0 %v1575
        %2160 = vmatpush2.bf16.msra.mxu0 %v1574
        %2161 = vmatprep.subr.bf16.mxu0 %v1571
        %2162 = vmatpush2.bf16.msra.mxu0 %v1570
        %2163 = vmatprep.subr.bf16.mxu0 %v1567
        %2164 = vmatpush2.bf16.msra.mxu0 %v1566
        %2165 = vmatprep.subr.bf16.mxu0 %v1563
        %2166 = vmatpush2.bf16.msra.mxu0 %v1562
        %2167 = vmatprep.mubr.bf16.mxu0 %v311
        %2168 = vmatmul.mubr.bf16.gmra.mxu0 %v310
        %v2169 = vpop.f32.mrf.mxu0
        %v2170 = vadd.f32 %v2129, %v2169
        %v2171 = vpop.f32.mrf.mxu0
        %v2172 = vadd.f32 %v2131, %v2171
        %v2173 = vpop.f32.mrf.mxu0
        %v2174 = vpop.f32.mrf.mxu0
        %2175 = vdwg.mxu0
        %s2176 = smul.u32 %s22, 8
        %s2177 = sshra.s32 %s2176, 3
        %s2178 = sand.u32 %s2176, 7
        %s2179 = smul.u32 %s2177, 4
        %s2180 = smul.addr %s2179, 8
        %s2181 = scalar_lea.vmem [#allocation2], %s2180
        %2182 = vst [vmem:[%s2181] sm:$0xff] %v2006
        %2183 = vst [vmem:[%s2181 + $0x8] sm:$0xff] %v2008
        %2184 = vst [vmem:[%s2181 + $0x10] sm:$0xff] %v2170
        %2185 = vst [vmem:[%s2181 + $0x18] sm:$0xff] %v2172
        %v2186 = vld [vmem:[#allocation3] sm:$0xf]
        %v2187 = vrot.slane %v2006, 4
        %v2188 = vadd.f32 %v2006, %v2187
        %v2189 = vrot.slane %v2188, 2
        %v2190 = vadd.f32 %v2188, %v2189
        %v2191 = vrot.slane %v2190, 1
        %v2192 = vadd.f32 %v2190, %v2191
        %v2193 = vrot.slane %v2008, 4
        %v2194 = vadd.f32 %v2008, %v2193
        %v2195 = vrot.slane %v2194, 2
        %v2196 = vadd.f32 %v2194, %v2195
        %v2197 = vrot.slane %v2196, 1
        %v2198 = vadd.f32 %v2196, %v2197
        %v2199 = vrot.slane %v2170, 4
        %v2200 = vadd.f32 %v2170, %v2199
        %v2201 = vrot.slane %v2200, 2
        %v2202 = vadd.f32 %v2200, %v2201
        %v2203 = vrot.slane %v2202, 1
        %v2204 = vadd.f32 %v2202, %v2203
        %v2205 = vrot.slane %v2172, 4
        %v2206 = vadd.f32 %v2172, %v2205
        %v2207 = vrot.slane %v2206, 2
        %v2208 = vadd.f32 %v2206, %v2207
        %v2209 = vrot.slane %v2208, 1
        %v2210 = vadd.f32 %v2208, %v2209
        %v2215 = vcombine.low %v2192, %v2198
        %v2216 = vcombine.low %v2204, %v2210
        %v2218 = vunpack.c.l.s4 1966171168
        %v2219 = vunpack.c.0.s8 %v2218
        %v2220 = vlaneseq
        %v2221 = vshrl.u32 %v2220, 7
        %v2222 = vsub.s32 %v2219, %v2221
        %v2223 = vrot.slane %v2215, %v2222
        %v2225 = vunpack.c.l.s4 1966171168
        %v2226 = vunpack.c.0.s8 %v2225
        %v2227 = vlaneseq
        %v2228 = vshrl.u32 %v2227, 7
        %v2229 = vsub.s32 %v2226, %v2228
        %v2230 = vrot.slane %v2216, %v2229
        %v2231 = vcombine.low %v2223, %v2230
        %v2233 = vunpack.c.l.s4 1966171168
        %v2234 = vunpack.c.0.s8 %v2233
        %v2235 = vlaneseq
        %v2236 = vshrl.u32 %v2235, 7
        %v2237 = vsub.s32 %v2234, %v2236
        %v2238 = vrot.slane %v2231, %v2237
        %v2240 = vadd.f32 %v2186, %v2238
        %v2241 = vlaneseq
        %vm2242 = vcmp.ge.s32.totalorder %v2241, 0
        %vm2243 = vcmp.lt.s32.totalorder %v2241, 512
        %vm2244 = vmand %vm2242, %vm2243
        %2245 = vst.msk [vmem:[#allocation3] sm:$0xf] %vm2244, %v2240
        %v2246 = vld [vmem:[#allocation4] sm:$0xf]
        %v2247 = vmul.f32 %v2006, %v2006
        %v2248 = vmul.f32 %v2008, %v2008
        %v2249 = vmul.f32 %v2170, %v2170
        %v2250 = vmul.f32 %v2172, %v2172
        %v2251 = vrot.slane %v2247, 4
        %v2252 = vadd.f32 %v2247, %v2251
        %v2253 = vrot.slane %v2252, 2
        %v2254 = vadd.f32 %v2252, %v2253
        %v2255 = vrot.slane %v2254, 1
        %v2256 = vadd.f32 %v2254, %v2255
        %v2257 = vrot.slane %v2248, 4
        %v2258 = vadd.f32 %v2248, %v2257
        %v2259 = vrot.slane %v2258, 2
        %v2260 = vadd.f32 %v2258, %v2259
        %v2261 = vrot.slane %v2260, 1
        %v2262 = vadd.f32 %v2260, %v2261
        %v2263 = vrot.slane %v2249, 4
        %v2264 = vadd.f32 %v2249, %v2263
        %v2265 = vrot.slane %v2264, 2
        %v2266 = vadd.f32 %v2264, %v2265
        %v2267 = vrot.slane %v2266, 1
        %v2268 = vadd.f32 %v2266, %v2267
        %v2269 = vrot.slane %v2250, 4
        %v2270 = vadd.f32 %v2250, %v2269
        %v2271 = vrot.slane %v2270, 2
        %v2272 = vadd.f32 %v2270, %v2271
        %v2273 = vrot.slane %v2272, 1
        %v2274 = vadd.f32 %v2272, %v2273
        %v2279 = vcombine.low %v2256, %v2262
        %v2280 = vcombine.low %v2268, %v2274
        %v2282 = vunpack.c.l.s4 1966171168
        %v2283 = vunpack.c.0.s8 %v2282
        %v2284 = vlaneseq
        %v2285 = vshrl.u32 %v2284, 7
        %v2286 = vsub.s32 %v2283, %v2285
        %v2287 = vrot.slane %v2279, %v2286
        %v2289 = vunpack.c.l.s4 1966171168
        %v2290 = vunpack.c.0.s8 %v2289
        %v2291 = vlaneseq
        %v2292 = vshrl.u32 %v2291, 7
        %v2293 = vsub.s32 %v2290, %v2292
        %v2294 = vrot.slane %v2280, %v2293
        %v2295 = vcombine.low %v2287, %v2294
        %v2297 = vunpack.c.l.s4 1966171168
        %v2298 = vunpack.c.0.s8 %v2297
        %v2299 = vlaneseq
        %v2300 = vshrl.u32 %v2299, 7
        %v2301 = vsub.s32 %v2298, %v2300
        %v2302 = vrot.slane %v2295, %v2301
        %v2304 = vadd.f32 %v2246, %v2302
        %2305 = vst.msk [vmem:[#allocation4] sm:$0xf] %vm2244, %v2304
        %p2306 = scmp.eq.s32.totalorder %s22, 3
        // Predicated region
        $region65: #{tpu_custom_call.1} parent=39 // pred_check
          %p2307 = pneg %p2306
        $region66: #{tpu_custom_call.1} parent=39 // pred_check_branch
          %2309 = sbr.rel (%p2307) target = $region68
        $region67: #{tpu_custom_call.1} parent=39 // pred_region
          %v2310 = vld [vmem:[#allocation13] ss:$8 sm:$0xf]
          %s2311 = scalar_lea.vmem [#allocation13], 1
          %v2312 = vld [vmem:[%s2311] ss:$8 sm:$0xf]
          %s2313 = scalar_lea.vmem [#allocation13], 2
          %v2314 = vld [vmem:[%s2313] ss:$8 sm:$0x3]
          %s2315 = scalar_lea.vmem [#allocation13], 3
          %v2316 = vld [vmem:[%s2315] ss:$8 sm:$0x3]
          %v2317 = vld [vmem:[#allocation13 + $0x4] ss:$0 sm:$0xff]
          %v2318 = vld [vmem:[#allocation13 + $0x5] ss:$0 sm:$0xff]
          %v2319 = vld [vmem:[#allocation2] sm:$0xff]
          %v2320 = vld [vmem:[#allocation2 + $0x8] sm:$0xff]
          %v2321 = vld [vmem:[#allocation2 + $0x10] sm:$0xff]
          %v2322 = vld [vmem:[#allocation2 + $0x18] sm:$0xff]
          %v2323 = vld [vmem:[#allocation2 + $0x20] sm:$0xff]
          %v2324 = vld [vmem:[#allocation2 + $0x28] sm:$0xff]
          %v2325 = vld [vmem:[#allocation2 + $0x30] sm:$0xff]
          %v2326 = vld [vmem:[#allocation2 + $0x38] sm:$0xff]
          %v2327 = vld [vmem:[#allocation2 + $0x40] sm:$0xff]
          %v2328 = vld [vmem:[#allocation2 + $0x48] sm:$0xff]
          %v2329 = vld [vmem:[#allocation2 + $0x50] sm:$0xff]
          %v2330 = vld [vmem:[#allocation2 + $0x58] sm:$0xff]
          %v2331 = vld [vmem:[#allocation2 + $0x60] sm:$0xff]
          %v2332 = vld [vmem:[#allocation2 + $0x68] sm:$0xff]
          %v2333 = vld [vmem:[#allocation2 + $0x70] sm:$0xff]
          %v2334 = vld [vmem:[#allocation2 + $0x78] sm:$0xff]
          %v2335 = vld [vmem:[#allocation3] sm:$0xf]
          %v2336 = vld [vmem:[#allocation4] sm:$0xf]
          %v2337 = vmul.f32 %v2335, 0.03125
          %v2338 = vmul.f32 %v2336, 0.03125
          %v2339 = vmul.f32 %v2337, %v2337
          %v2340 = vsub.f32 %v2338, %v2339
          %v2341 = vmax.f32 %v2340, 0.0
          %v2342 = vadd.f32 %v2341, 1e-05
          %v2343 = vrsqrt.pop %v2342
          %v2344 = vmul.f32 %v2310, %v2343
          %v2345 = vmul.f32 %v2337, %v2344
          %v2346 = vsub.f32 %v2312, %v2345
          %v2348 = vlaneseq
          %v2349 = vshrl.u32 %v2348, 7
          %v2350 = vsub.s32 0, %v2349
          %v2351 = vrot.slane %v2344, %v2350
          %v2352 = vlaneseq
          %v2353 = vshrl.u32 %v2352, 7
          %v2354 = vsub.s32 1, %v2353
          %v2355 = vrot.slane %v2344, %v2354
          %v2356 = vlaneseq
          %v2357 = vshrl.u32 %v2356, 7
          %v2358 = vsub.s32 2, %v2357
          %v2359 = vrot.slane %v2344, %v2358
          %v2360 = vlaneseq
          %v2361 = vshrl.u32 %v2360, 7
          %v2362 = vsub.s32 3, %v2361
          %v2363 = vrot.slane %v2344, %v2362
          %v2368 = vmul.f32 %v2319, %v2351
          %v2369 = vmul.f32 %v2320, %v2355
          %v2370 = vmul.f32 %v2321, %v2359
          %v2371 = vmul.f32 %v2322, %v2363
          %v2372 = vmul.f32 %v2323, %v2351
          %v2373 = vmul.f32 %v2324, %v2355
          %v2374 = vmul.f32 %v2325, %v2359
          %v2375 = vmul.f32 %v2326, %v2363
          %v2376 = vmul.f32 %v2327, %v2351
          %v2377 = vmul.f32 %v2328, %v2355
          %v2378 = vmul.f32 %v2329, %v2359
          %v2379 = vmul.f32 %v2330, %v2363
          %v2380 = vmul.f32 %v2331, %v2351
          %v2381 = vmul.f32 %v2332, %v2355
          %v2382 = vmul.f32 %v2333, %v2359
          %v2383 = vmul.f32 %v2334, %v2363
          %v2385 = vlaneseq
          %v2386 = vshrl.u32 %v2385, 7
          %v2387 = vsub.s32 0, %v2386
          %v2388 = vrot.slane %v2346, %v2387
          %v2389 = vlaneseq
          %v2390 = vshrl.u32 %v2389, 7
          %v2391 = vsub.s32 1, %v2390
          %v2392 = vrot.slane %v2346, %v2391
          %v2393 = vlaneseq
          %v2394 = vshrl.u32 %v2393, 7
          %v2395 = vsub.s32 2, %v2394
          %v2396 = vrot.slane %v2346, %v2395
          %v2397 = vlaneseq
          %v2398 = vshrl.u32 %v2397, 7
          %v2399 = vsub.s32 3, %v2398
          %v2400 = vrot.slane %v2346, %v2399
          %v2405 = vadd.f32 %v2368, %v2388
          %v2406 = vadd.f32 %v2369, %v2392
          %v2407 = vadd.f32 %v2370, %v2396
          %v2408 = vadd.f32 %v2371, %v2400
          %v2409 = vadd.f32 %v2372, %v2388
          %v2410 = vadd.f32 %v2373, %v2392
          %v2411 = vadd.f32 %v2374, %v2396
          %v2412 = vadd.f32 %v2375, %v2400
          %v2413 = vadd.f32 %v2376, %v2388
          %v2414 = vadd.f32 %v2377, %v2392
          %v2415 = vadd.f32 %v2378, %v2396
          %v2416 = vadd.f32 %v2379, %v2400
          %v2417 = vadd.f32 %v2380, %v2388
          %v2418 = vadd.f32 %v2381, %v2392
          %v2419 = vadd.f32 %v2382, %v2396
          %v2420 = vadd.f32 %v2383, %v2400
          %v2421 = vmax.f32 %v2405, 0.0
          %v2422 = vmax.f32 %v2406, 0.0
          %v2423 = vmax.f32 %v2407, 0.0
          %v2424 = vmax.f32 %v2408, 0.0
          %v2425 = vmax.f32 %v2409, 0.0
          %v2426 = vmax.f32 %v2410, 0.0
          %v2427 = vmax.f32 %v2411, 0.0
          %v2428 = vmax.f32 %v2412, 0.0
          %v2429 = vmax.f32 %v2413, 0.0
          %v2430 = vmax.f32 %v2414, 0.0
          %v2431 = vmax.f32 %v2415, 0.0
          %v2432 = vmax.f32 %v2416, 0.0
          %v2433 = vmax.f32 %v2417, 0.0
          %v2434 = vmax.f32 %v2418, 0.0
          %v2435 = vmax.f32 %v2419, 0.0
          %v2436 = vmax.f32 %v2420, 0.0
          %v2437 = vpack.c.bf16 %v2425, %v2421
          %v2438 = vpack.c.bf16 %v2426, %v2422
          %v2439 = vpack.c.bf16 %v2427, %v2423
          %v2440 = vpack.c.bf16 %v2428, %v2424
          %v2441 = vpack.c.bf16 %v2433, %v2429
          %v2442 = vpack.c.bf16 %v2434, %v2430
          %v2443 = vpack.c.bf16 %v2435, %v2431
          %v2444 = vpack.c.bf16 %v2436, %v2432
          %v2445 = vld [vmem:[#allocation10] sm:$0xff]
          %v2446 = vld [vmem:[#allocation10 + $0x8] sm:$0xff]
          %v2447 = vld [vmem:[#allocation10 + $0x10] sm:$0xff]
          %v2448 = vld [vmem:[#allocation10 + $0x18] sm:$0xff]
          %v2449 = vld [vmem:[#allocation10 + $0x20] sm:$0xff]
          %v2450 = vld [vmem:[#allocation10 + $0x28] sm:$0xff]
          %v2451 = vld [vmem:[#allocation10 + $0x30] sm:$0xff]
          %v2452 = vld [vmem:[#allocation10 + $0x38] sm:$0xff]
          %v2453 = vld [vmem:[#allocation10 + $0x40] sm:$0xff]
          %v2454 = vld [vmem:[#allocation10 + $0x48] sm:$0xff]
          %v2455 = vld [vmem:[#allocation10 + $0x50] sm:$0xff]
          %v2456 = vld [vmem:[#allocation10 + $0x58] sm:$0xff]
          %v2457 = vld [vmem:[#allocation10 + $0x60] sm:$0xff]
          %v2458 = vld [vmem:[#allocation10 + $0x68] sm:$0xff]
          %v2459 = vld [vmem:[#allocation10 + $0x70] sm:$0xff]
          %v2460 = vld [vmem:[#allocation10 + $0x78] sm:$0xff]
          %v2461 = vld [vmem:[#allocation10 + $0x80] sm:$0xff]
          %v2462 = vld [vmem:[#allocation10 + $0x88] sm:$0xff]
          %v2463 = vld [vmem:[#allocation10 + $0x90] sm:$0xff]
          %v2464 = vld [vmem:[#allocation10 + $0x98] sm:$0xff]
          %v2465 = vld [vmem:[#allocation10 + $0xa0] sm:$0xff]
          %v2466 = vld [vmem:[#allocation10 + $0xa8] sm:$0xff]
          %v2467 = vld [vmem:[#allocation10 + $0xb0] sm:$0xff]
          %v2468 = vld [vmem:[#allocation10 + $0xb8] sm:$0xff]
          %v2469 = vld [vmem:[#allocation10 + $0xc0] sm:$0xff]
          %v2470 = vld [vmem:[#allocation10 + $0xc8] sm:$0xff]
          %v2471 = vld [vmem:[#allocation10 + $0xd0] sm:$0xff]
          %v2472 = vld [vmem:[#allocation10 + $0xd8] sm:$0xff]
          %v2473 = vld [vmem:[#allocation10 + $0xe0] sm:$0xff]
          %v2474 = vld [vmem:[#allocation10 + $0xe8] sm:$0xff]
          %v2475 = vld [vmem:[#allocation10 + $0xf0] sm:$0xff]
          %v2476 = vld [vmem:[#allocation10 + $0xf8] sm:$0xff]
          %v2477 = vld [vmem:[#allocation10 + $0x100] sm:$0xff]
          %v2478 = vld [vmem:[#allocation10 + $0x108] sm:$0xff]
          %v2479 = vld [vmem:[#allocation10 + $0x110] sm:$0xff]
          %v2480 = vld [vmem:[#allocation10 + $0x118] sm:$0xff]
          %v2481 = vld [vmem:[#allocation10 + $0x120] sm:$0xff]
          %v2482 = vld [vmem:[#allocation10 + $0x128] sm:$0xff]
          %v2483 = vld [vmem:[#allocation10 + $0x130] sm:$0xff]
          %v2484 = vld [vmem:[#allocation10 + $0x138] sm:$0xff]
          %v2485 = vld [vmem:[#allocation10 + $0x140] sm:$0xff]
          %v2486 = vld [vmem:[#allocation10 + $0x148] sm:$0xff]
          %v2487 = vld [vmem:[#allocation10 + $0x150] sm:$0xff]
          %v2488 = vld [vmem:[#allocation10 + $0x158] sm:$0xff]
          %v2489 = vld [vmem:[#allocation10 + $0x160] sm:$0xff]
          %v2490 = vld [vmem:[#allocation10 + $0x168] sm:$0xff]
          %v2491 = vld [vmem:[#allocation10 + $0x170] sm:$0xff]
          %v2492 = vld [vmem:[#allocation10 + $0x178] sm:$0xff]
          %v2493 = vld [vmem:[#allocation10 + $0x180] sm:$0xff]
          %v2494 = vld [vmem:[#allocation10 + $0x188] sm:$0xff]
          %v2495 = vld [vmem:[#allocation10 + $0x190] sm:$0xff]
          %v2496 = vld [vmem:[#allocation10 + $0x198] sm:$0xff]
          %v2497 = vld [vmem:[#allocation10 + $0x1a0] sm:$0xff]
          %v2498 = vld [vmem:[#allocation10 + $0x1a8] sm:$0xff]
          %v2499 = vld [vmem:[#allocation10 + $0x1b0] sm:$0xff]
          %v2500 = vld [vmem:[#allocation10 + $0x1b8] sm:$0xff]
          %v2501 = vld [vmem:[#allocation10 + $0x1c0] sm:$0xff]
          %v2502 = vld [vmem:[#allocation10 + $0x1c8] sm:$0xff]
          %v2503 = vld [vmem:[#allocation10 + $0x1d0] sm:$0xff]
          %v2504 = vld [vmem:[#allocation10 + $0x1d8] sm:$0xff]
          %v2505 = vld [vmem:[#allocation10 + $0x1e0] sm:$0xff]
          %v2506 = vld [vmem:[#allocation10 + $0x1e8] sm:$0xff]
          %v2507 = vld [vmem:[#allocation10 + $0x1f0] sm:$0xff]
          %v2508 = vld [vmem:[#allocation10 + $0x1f8] sm:$0xff]
          %v2573 = vunpack.c.l.b16 %v2445
          %v2574 = vunpack.c.h.b16 %v2445
          %v2575 = vunpack.c.l.b16 %v2446
          %v2576 = vunpack.c.h.b16 %v2446
          %v2577 = vunpack.c.l.b16 %v2447
          %v2578 = vunpack.c.h.b16 %v2447
          %v2579 = vunpack.c.l.b16 %v2448
          %v2580 = vunpack.c.h.b16 %v2448
          %v2581 = vunpack.c.l.b16 %v2449
          %v2582 = vunpack.c.h.b16 %v2449
          %v2583 = vunpack.c.l.b16 %v2450
          %v2584 = vunpack.c.h.b16 %v2450
          %v2585 = vunpack.c.l.b16 %v2451
          %v2586 = vunpack.c.h.b16 %v2451
          %v2587 = vunpack.c.l.b16 %v2452
          %v2588 = vunpack.c.h.b16 %v2452
          %v2589 = vunpack.c.l.b16 %v2453
          %v2590 = vunpack.c.h.b16 %v2453
          %v2591 = vunpack.c.l.b16 %v2454
          %v2592 = vunpack.c.h.b16 %v2454
          %v2593 = vunpack.c.l.b16 %v2455
          %v2594 = vunpack.c.h.b16 %v2455
          %v2595 = vunpack.c.l.b16 %v2456
          %v2596 = vunpack.c.h.b16 %v2456
          %v2597 = vunpack.c.l.b16 %v2457
          %v2598 = vunpack.c.h.b16 %v2457
          %v2599 = vunpack.c.l.b16 %v2458
          %v2600 = vunpack.c.h.b16 %v2458
          %v2601 = vunpack.c.l.b16 %v2459
          %v2602 = vunpack.c.h.b16 %v2459
          %v2603 = vunpack.c.l.b16 %v2460
          %v2604 = vunpack.c.h.b16 %v2460
          %v2605 = vunpack.c.l.b16 %v2461
          %v2606 = vunpack.c.h.b16 %v2461
          %v2607 = vunpack.c.l.b16 %v2462
          %v2608 = vunpack.c.h.b16 %v2462
          %v2609 = vunpack.c.l.b16 %v2463
          %v2610 = vunpack.c.h.b16 %v2463
          %v2611 = vunpack.c.l.b16 %v2464
          %v2612 = vunpack.c.h.b16 %v2464
          %v2613 = vunpack.c.l.b16 %v2465
          %v2614 = vunpack.c.h.b16 %v2465
          %v2615 = vunpack.c.l.b16 %v2466
          %v2616 = vunpack.c.h.b16 %v2466
          %v2617 = vunpack.c.l.b16 %v2467
          %v2618 = vunpack.c.h.b16 %v2467
          %v2619 = vunpack.c.l.b16 %v2468
          %v2620 = vunpack.c.h.b16 %v2468
          %v2621 = vunpack.c.l.b16 %v2469
          %v2622 = vunpack.c.h.b16 %v2469
          %v2623 = vunpack.c.l.b16 %v2470
          %v2624 = vunpack.c.h.b16 %v2470
          %v2625 = vunpack.c.l.b16 %v2471
          %v2626 = vunpack.c.h.b16 %v2471
          %v2627 = vunpack.c.l.b16 %v2472
          %v2628 = vunpack.c.h.b16 %v2472
          %v2629 = vunpack.c.l.b16 %v2473
          %v2630 = vunpack.c.h.b16 %v2473
          %v2631 = vunpack.c.l.b16 %v2474
          %v2632 = vunpack.c.h.b16 %v2474
          %v2633 = vunpack.c.l.b16 %v2475
          %v2634 = vunpack.c.h.b16 %v2475
          %v2635 = vunpack.c.l.b16 %v2476
          %v2636 = vunpack.c.h.b16 %v2476
          %v2637 = vunpack.c.l.b16 %v2477
          %v2638 = vunpack.c.h.b16 %v2477
          %v2639 = vunpack.c.l.b16 %v2478
          %v2640 = vunpack.c.h.b16 %v2478
          %v2641 = vunpack.c.l.b16 %v2479
          %v2642 = vunpack.c.h.b16 %v2479
          %v2643 = vunpack.c.l.b16 %v2480
          %v2644 = vunpack.c.h.b16 %v2480
          %v2645 = vunpack.c.l.b16 %v2481
          %v2646 = vunpack.c.h.b16 %v2481
          %v2647 = vunpack.c.l.b16 %v2482
          %v2648 = vunpack.c.h.b16 %v2482
          %v2649 = vunpack.c.l.b16 %v2483
          %v2650 = vunpack.c.h.b16 %v2483
          %v2651 = vunpack.c.l.b16 %v2484
          %v2652 = vunpack.c.h.b16 %v2484
          %v2653 = vunpack.c.l.b16 %v2485
          %v2654 = vunpack.c.h.b16 %v2485
          %v2655 = vunpack.c.l.b16 %v2486
          %v2656 = vunpack.c.h.b16 %v2486
          %v2657 = vunpack.c.l.b16 %v2487
          %v2658 = vunpack.c.h.b16 %v2487
          %v2659 = vunpack.c.l.b16 %v2488
          %v2660 = vunpack.c.h.b16 %v2488
          %v2661 = vunpack.c.l.b16 %v2489
          %v2662 = vunpack.c.h.b16 %v2489
          %v2663 = vunpack.c.l.b16 %v2490
          %v2664 = vunpack.c.h.b16 %v2490
          %v2665 = vunpack.c.l.b16 %v2491
          %v2666 = vunpack.c.h.b16 %v2491
          %v2667 = vunpack.c.l.b16 %v2492
          %v2668 = vunpack.c.h.b16 %v2492
          %v2669 = vunpack.c.l.b16 %v2493
          %v2670 = vunpack.c.h.b16 %v2493
          %v2671 = vunpack.c.l.b16 %v2494
          %v2672 = vunpack.c.h.b16 %v2494
          %v2673 = vunpack.c.l.b16 %v2495
          %v2674 = vunpack.c.h.b16 %v2495
          %v2675 = vunpack.c.l.b16 %v2496
          %v2676 = vunpack.c.h.b16 %v2496
          %v2677 = vunpack.c.l.b16 %v2497
          %v2678 = vunpack.c.h.b16 %v2497
          %v2679 = vunpack.c.l.b16 %v2498
          %v2680 = vunpack.c.h.b16 %v2498
          %v2681 = vunpack.c.l.b16 %v2499
          %v2682 = vunpack.c.h.b16 %v2499
          %v2683 = vunpack.c.l.b16 %v2500
          %v2684 = vunpack.c.h.b16 %v2500
          %v2685 = vunpack.c.l.b16 %v2501
          %v2686 = vunpack.c.h.b16 %v2501
          %v2687 = vunpack.c.l.b16 %v2502
          %v2688 = vunpack.c.h.b16 %v2502
          %v2689 = vunpack.c.l.b16 %v2503
          %v2690 = vunpack.c.h.b16 %v2503
          %v2691 = vunpack.c.l.b16 %v2504
          %v2692 = vunpack.c.h.b16 %v2504
          %v2693 = vunpack.c.l.b16 %v2505
          %v2694 = vunpack.c.h.b16 %v2505
          %v2695 = vunpack.c.l.b16 %v2506
          %v2696 = vunpack.c.h.b16 %v2506
          %v2697 = vunpack.c.l.b16 %v2507
          %v2698 = vunpack.c.h.b16 %v2507
          %v2699 = vunpack.c.l.b16 %v2508
          %v2700 = vunpack.c.h.b16 %v2508
          %v2701 = vpack.c.b16 %v2575, %v2573
          %v2702 = vpack.c.b16 %v2576, %v2574
          %v2703 = vpack.c.b16 %v2579, %v2577
          %v2704 = vpack.c.b16 %v2580, %v2578
          %v2705 = vpack.c.b16 %v2583, %v2581
          %v2706 = vpack.c.b16 %v2584, %v2582
          %v2707 = vpack.c.b16 %v2587, %v2585
          %v2708 = vpack.c.b16 %v2588, %v2586
          %v2709 = vpack.c.b16 %v2591, %v2589
          %v2710 = vpack.c.b16 %v2592, %v2590
          %v2711 = vpack.c.b16 %v2595, %v2593
          %v2712 = vpack.c.b16 %v2596, %v2594
          %v2713 = vpack.c.b16 %v2599, %v2597
          %v2714 = vpack.c.b16 %v2600, %v2598
          %v2715 = vpack.c.b16 %v2603, %v2601
          %v2716 = vpack.c.b16 %v2604, %v2602
          %v2717 = vpack.c.b16 %v2607, %v2605
          %v2718 = vpack.c.b16 %v2608, %v2606
          %v2719 = vpack.c.b16 %v2611, %v2609
          %v2720 = vpack.c.b16 %v2612, %v2610
          %v2721 = vpack.c.b16 %v2615, %v2613
          %v2722 = vpack.c.b16 %v2616, %v2614
          %v2723 = vpack.c.b16 %v2619, %v2617
          %v2724 = vpack.c.b16 %v2620, %v2618
          %v2725 = vpack.c.b16 %v2623, %v2621
          %v2726 = vpack.c.b16 %v2624, %v2622
          %v2727 = vpack.c.b16 %v2627, %v2625
          %v2728 = vpack.c.b16 %v2628, %v2626
          %v2729 = vpack.c.b16 %v2631, %v2629
          %v2730 = vpack.c.b16 %v2632, %v2630
          %v2731 = vpack.c.b16 %v2635, %v2633
          %v2732 = vpack.c.b16 %v2636, %v2634
          %v2733 = vpack.c.b16 %v2639, %v2637
          %v2734 = vpack.c.b16 %v2640, %v2638
          %v2735 = vpack.c.b16 %v2643, %v2641
          %v2736 = vpack.c.b16 %v2644, %v2642
          %v2737 = vpack.c.b16 %v2647, %v2645
          %v2738 = vpack.c.b16 %v2648, %v2646
          %v2739 = vpack.c.b16 %v2651, %v2649
          %v2740 = vpack.c.b16 %v2652, %v2650
          %v2741 = vpack.c.b16 %v2655, %v2653
          %v2742 = vpack.c.b16 %v2656, %v2654
          %v2743 = vpack.c.b16 %v2659, %v2657
          %v2744 = vpack.c.b16 %v2660, %v2658
          %v2745 = vpack.c.b16 %v2663, %v2661
          %v2746 = vpack.c.b16 %v2664, %v2662
          %v2747 = vpack.c.b16 %v2667, %v2665
          %v2748 = vpack.c.b16 %v2668, %v2666
          %v2749 = vpack.c.b16 %v2671, %v2669
          %v2750 = vpack.c.b16 %v2672, %v2670
          %v2751 = vpack.c.b16 %v2675, %v2673
          %v2752 = vpack.c.b16 %v2676, %v2674
          %v2753 = vpack.c.b16 %v2679, %v2677
          %v2754 = vpack.c.b16 %v2680, %v2678
          %v2755 = vpack.c.b16 %v2683, %v2681
          %v2756 = vpack.c.b16 %v2684, %v2682
          %v2757 = vpack.c.b16 %v2687, %v2685
          %v2758 = vpack.c.b16 %v2688, %v2686
          %v2759 = vpack.c.b16 %v2691, %v2689
          %v2760 = vpack.c.b16 %v2692, %v2690
          %v2761 = vpack.c.b16 %v2695, %v2693
          %v2762 = vpack.c.b16 %v2696, %v2694
          %v2763 = vpack.c.b16 %v2699, %v2697
          %v2764 = vpack.c.b16 %v2700, %v2698
          %2829 = vmatprep.subr.bf16.mxu0 %v2716
          %2830 = vmatpush1.bf16.msra.mxu0 %v2715
          %2831 = vmatprep.subr.bf16.mxu0 %v2714
          %2832 = vmatpush1.bf16.msra.mxu0 %v2713
          %2833 = vmatprep.subr.bf16.mxu0 %v2712
          %2834 = vmatpush1.bf16.msra.mxu0 %v2711
          %2835 = vmatprep.subr.bf16.mxu0 %v2710
          %2836 = vmatpush1.bf16.msra.mxu0 %v2709
          %2837 = vmatprep.subr.bf16.mxu0 %v2708
          %2838 = vmatpush1.bf16.msra.mxu0 %v2707
          %2839 = vmatprep.subr.bf16.mxu0 %v2706
          %2840 = vmatpush1.bf16.msra.mxu0 %v2705
          %2841 = vmatprep.subr.bf16.mxu0 %v2704
          %2842 = vmatpush1.bf16.msra.mxu0 %v2703
          %2843 = vmatprep.subr.bf16.mxu0 %v2702
          %2844 = vmatpush1.bf16.msra.mxu0 %v2701
          %2845 = vmatprep.subr.bf16.mxu0 %v2732
          %2846 = vmatpush2.bf16.msra.mxu0 %v2731
          %2847 = vmatprep.subr.bf16.mxu0 %v2730
          %2848 = vmatpush2.bf16.msra.mxu0 %v2729
          %2849 = vmatprep.subr.bf16.mxu0 %v2728
          %2850 = vmatpush2.bf16.msra.mxu0 %v2727
          %2851 = vmatprep.subr.bf16.mxu0 %v2726
          %2852 = vmatpush2.bf16.msra.mxu0 %v2725
          %2853 = vmatprep.subr.bf16.mxu0 %v2724
          %2854 = vmatpush2.bf16.msra.mxu0 %v2723
          %2855 = vmatprep.subr.bf16.mxu0 %v2722
          %2856 = vmatpush2.bf16.msra.mxu0 %v2721
          %2857 = vmatprep.subr.bf16.mxu0 %v2720
          %2858 = vmatpush2.bf16.msra.mxu0 %v2719
          %2859 = vmatprep.subr.bf16.mxu0 %v2718
          %2860 = vmatpush2.bf16.msra.mxu0 %v2717
          %2861 = vmatprep.mubr.bf16.mxu0 %v2438
          %2862 = vmatmul.mubr.bf16.gmra.mxu0 %v2437
          %v2863 = vpop.f32.mrf.mxu0
          %v2864 = vadd.f32 0.0, %v2863
          %v2865 = vpop.f32.mrf.mxu0
          %v2866 = vadd.f32 0.0, %v2865
          %v2867 = vpop.f32.mrf.mxu0
          %v2868 = vadd.f32 0.0, %v2867
          %v2869 = vpop.f32.mrf.mxu0
          %v2870 = vadd.f32 0.0, %v2869
          %2871 = vmatprep.mubr.bf16.mxu0 %v2442
          %2872 = vmatmul.mubr.bf16.gmra.mxu0 %v2441
          %v2873 = vpop.f32.mrf.mxu0
          %v2874 = vadd.f32 0.0, %v2873
          %v2875 = vpop.f32.mrf.mxu0
          %v2876 = vadd.f32 0.0, %v2875
          %v2877 = vpop.f32.mrf.mxu0
          %v2878 = vadd.f32 0.0, %v2877
          %v2879 = vpop.f32.mrf.mxu0
          %v2880 = vadd.f32 0.0, %v2879
          %2881 = vdwg.mxu0
          %2882 = vmatprep.subr.bf16.mxu0 %v2748
          %2883 = vmatpush1.bf16.msra.mxu0 %v2747
          %2884 = vmatprep.subr.bf16.mxu0 %v2746
          %2885 = vmatpush1.bf16.msra.mxu0 %v2745
          %2886 = vmatprep.subr.bf16.mxu0 %v2744
          %2887 = vmatpush1.bf16.msra.mxu0 %v2743
          %2888 = vmatprep.subr.bf16.mxu0 %v2742
          %2889 = vmatpush1.bf16.msra.mxu0 %v2741
          %2890 = vmatprep.subr.bf16.mxu0 %v2740
          %2891 = vmatpush1.bf16.msra.mxu0 %v2739
          %2892 = vmatprep.subr.bf16.mxu0 %v2738
          %2893 = vmatpush1.bf16.msra.mxu0 %v2737
          %2894 = vmatprep.subr.bf16.mxu0 %v2736
          %2895 = vmatpush1.bf16.msra.mxu0 %v2735
          %2896 = vmatprep.subr.bf16.mxu0 %v2734
          %2897 = vmatpush1.bf16.msra.mxu0 %v2733
          %2898 = vmatprep.subr.bf16.mxu0 %v2764
          %2899 = vmatpush2.bf16.msra.mxu0 %v2763
          %2900 = vmatprep.subr.bf16.mxu0 %v2762
          %2901 = vmatpush2.bf16.msra.mxu0 %v2761
          %2902 = vmatprep.subr.bf16.mxu0 %v2760
          %2903 = vmatpush2.bf16.msra.mxu0 %v2759
          %2904 = vmatprep.subr.bf16.mxu0 %v2758
          %2905 = vmatpush2.bf16.msra.mxu0 %v2757
          %2906 = vmatprep.subr.bf16.mxu0 %v2756
          %2907 = vmatpush2.bf16.msra.mxu0 %v2755
          %2908 = vmatprep.subr.bf16.mxu0 %v2754
          %2909 = vmatpush2.bf16.msra.mxu0 %v2753
          %2910 = vmatprep.subr.bf16.mxu0 %v2752
          %2911 = vmatpush2.bf16.msra.mxu0 %v2751
          %2912 = vmatprep.subr.bf16.mxu0 %v2750
          %2913 = vmatpush2.bf16.msra.mxu0 %v2749
          %2914 = vmatprep.mubr.bf16.mxu0 %v2440
          %2915 = vmatmul.mubr.bf16.gmra.mxu0 %v2439
          %v2916 = vpop.f32.mrf.mxu0
          %v2917 = vadd.f32 %v2864, %v2916
          %v2918 = vpop.f32.mrf.mxu0
          %v2919 = vadd.f32 %v2866, %v2918
          %v2920 = vpop.f32.mrf.mxu0
          %v2921 = vadd.f32 %v2868, %v2920
          %v2922 = vpop.f32.mrf.mxu0
          %v2923 = vadd.f32 %v2870, %v2922
          %2924 = vmatprep.mubr.bf16.mxu0 %v2444
          %2925 = vmatmul.mubr.bf16.gmra.mxu0 %v2443
          %v2926 = vpop.f32.mrf.mxu0
          %v2927 = vadd.f32 %v2874, %v2926
          %v2928 = vpop.f32.mrf.mxu0
          %v2929 = vadd.f32 %v2876, %v2928
          %v2930 = vpop.f32.mrf.mxu0
          %v2931 = vadd.f32 %v2878, %v2930
          %v2932 = vpop.f32.mrf.mxu0
          %v2933 = vadd.f32 %v2880, %v2932
          %2934 = vdwg.mxu0
          %v2935 = vadd.f32 %v2917, %v2921
          %v2936 = vadd.f32 %v2935, %v2927
          %v2937 = vadd.f32 %v2936, %v2931
          %v2938 = vrot.slane %v2937, 4
          %v2939 = vadd.f32 %v2937, %v2938
          %v2940 = vrot.slane %v2939, 2
          %v2941 = vadd.f32 %v2939, %v2940
          %v2942 = vrot.slane %v2941, 1
          %v2943 = vadd.f32 %v2941, %v2942
          %v2944 = vadd.f32 %v2919, %v2923
          %v2945 = vadd.f32 %v2944, %v2929
          %v2946 = vadd.f32 %v2945, %v2933
          %v2947 = vrot.slane %v2946, 4
          %v2948 = vadd.f32 %v2946, %v2947
          %v2949 = vrot.slane %v2948, 2
          %v2950 = vadd.f32 %v2948, %v2949
          %v2951 = vrot.slane %v2950, 1
          %v2952 = vadd.f32 %v2950, %v2951
          %v2953 = vmul.f32 %v2917, %v2917
          %v2954 = vmul.f32 %v2919, %v2919
          %v2955 = vmul.f32 %v2921, %v2921
          %v2956 = vmul.f32 %v2923, %v2923
          %v2957 = vmul.f32 %v2927, %v2927
          %v2958 = vmul.f32 %v2929, %v2929
          %v2959 = vmul.f32 %v2931, %v2931
          %v2960 = vmul.f32 %v2933, %v2933
          %v2961 = vadd.f32 %v2953, %v2955
          %v2962 = vadd.f32 %v2961, %v2957
          %v2963 = vadd.f32 %v2962, %v2959
          %v2964 = vrot.slane %v2963, 4
          %v2965 = vadd.f32 %v2963, %v2964
          %v2966 = vrot.slane %v2965, 2
          %v2967 = vadd.f32 %v2965, %v2966
          %v2968 = vrot.slane %v2967, 1
          %v2969 = vadd.f32 %v2967, %v2968
          %v2970 = vadd.f32 %v2954, %v2956
          %v2971 = vadd.f32 %v2970, %v2958
          %v2972 = vadd.f32 %v2971, %v2960
          %v2973 = vrot.slane %v2972, 4
          %v2974 = vadd.f32 %v2972, %v2973
          %v2975 = vrot.slane %v2974, 2
          %v2976 = vadd.f32 %v2974, %v2975
          %v2977 = vrot.slane %v2976, 1
          %v2978 = vadd.f32 %v2976, %v2977
          %v2979 = vmul.f32 %v2943, 0.03125
          %v2980 = vmul.f32 %v2952, 0.03125
          %v2981 = vmul.f32 %v2969, 0.03125
          %v2982 = vmul.f32 %v2978, 0.03125
          %v2983 = vmul.f32 %v2979, %v2979
          %v2984 = vmul.f32 %v2980, %v2980
          %v2985 = vsub.f32 %v2981, %v2983
          %v2986 = vsub.f32 %v2982, %v2984
          %v2987 = vmax.f32 %v2985, 0.0
          %v2988 = vmax.f32 %v2986, 0.0
          %v2989 = vadd.f32 %v2987, 1e-05
          %v2990 = vadd.f32 %v2988, 1e-05
          %v2991 = vrsqrt.pop %v2989
          %v2992 = vrsqrt.pop %v2990
          %v2995 = vcombine.low %v2991, %v2992
          %v2997 = vunpack.c.l.s4 1966171168
          %v2998 = vunpack.c.0.s8 %v2997
          %v2999 = vlaneseq
          %v3000 = vshrl.u32 %v2999, 7
          %v3001 = vsub.s32 %v2998, %v3000
          %v3002 = vrot.slane %v2995, %v3001
          %v3004 = vunpack.c.l.s4 1966171168
          %v3005 = vunpack.c.0.s8 %v3004
          %v3006 = vlaneseq
          %v3007 = vshrl.u32 %v3006, 7
          %v3008 = vsub.s32 %v3005, %v3007
          %v3009 = vrot.slane %v3002, %v3008
          %v3011 = vmul.f32 %v2314, %v3009
          %v3013 = vlaneseq
          %v3014 = vshrl.u32 %v3013, 7
          %v3015 = vsub.s32 0, %v3014
          %v3016 = vrot.slane %v3011, %v3015
          %v3017 = vlaneseq
          %v3018 = vshrl.u32 %v3017, 7
          %v3019 = vsub.s32 1, %v3018
          %v3020 = vrot.slane %v3011, %v3019
          %v3023 = vmul.f32 %v2979, %v3016
          %v3024 = vmul.f32 %v2980, %v3020
          %v3027 = vcombine.low %v3023, %v3024
          %v3029 = vunpack.c.l.s4 1966171168
          %v3030 = vunpack.c.0.s8 %v3029
          %v3031 = vlaneseq
          %v3032 = vshrl.u32 %v3031, 7
          %v3033 = vsub.s32 %v3030, %v3032
          %v3034 = vrot.slane %v3027, %v3033
          %v3036 = vunpack.c.l.s4 1966171168
          %v3037 = vunpack.c.0.s8 %v3036
          %v3038 = vlaneseq
          %v3039 = vshrl.u32 %v3038, 7
          %v3040 = vsub.s32 %v3037, %v3039
          %v3041 = vrot.slane %v3034, %v3040
          %v3043 = vsub.f32 %v2316, %v3041
          %v3044 = vmul.f32 %v2917, %v3016
          %v3045 = vmul.f32 %v2919, %v3020
          %v3046 = vmul.f32 %v2921, %v3016
          %v3047 = vmul.f32 %v2923, %v3020
          %v3048 = vmul.f32 %v2927, %v3016
          %v3049 = vmul.f32 %v2929, %v3020
          %v3050 = vmul.f32 %v2931, %v3016
          %v3051 = vmul.f32 %v2933, %v3020
          %v3053 = vlaneseq
          %v3054 = vshrl.u32 %v3053, 7
          %v3055 = vsub.s32 0, %v3054
          %v3056 = vrot.slane %v3043, %v3055
          %v3057 = vlaneseq
          %v3058 = vshrl.u32 %v3057, 7
          %v3059 = vsub.s32 1, %v3058
          %v3060 = vrot.slane %v3043, %v3059
          %v3063 = vadd.f32 %v3044, %v3056
          %v3064 = vadd.f32 %v3045, %v3060
          %v3065 = vadd.f32 %v3046, %v3056
          %v3066 = vadd.f32 %v3047, %v3060
          %v3067 = vadd.f32 %v3048, %v3056
          %v3068 = vadd.f32 %v3049, %v3060
          %v3069 = vadd.f32 %v3050, %v3056
          %v3070 = vadd.f32 %v3051, %v3060
          %v3071 = vmax.f32 %v3063, 0.0
          %v3072 = vmax.f32 %v3064, 0.0
          %v3073 = vmax.f32 %v3065, 0.0
          %v3074 = vmax.f32 %v3066, 0.0
          %v3075 = vmax.f32 %v3067, 0.0
          %v3076 = vmax.f32 %v3068, 0.0
          %v3077 = vmax.f32 %v3069, 0.0
          %v3078 = vmax.f32 %v3070, 0.0
          %v3079 = vpack.c.bf16 %v3073, %v3071
          %v3080 = vpack.c.bf16 %v3074, %v3072
          %v3081 = vpack.c.bf16 %v3077, %v3075
          %v3082 = vpack.c.bf16 %v3078, %v3076
          %v3083 = vld [vmem:[#allocation11] sm:$0xf]
          %v3084 = vld [vmem:[#allocation11 + $0x4] sm:$0xf]
          %v3085 = vld [vmem:[#allocation11 + $0x8] sm:$0xf]
          %v3086 = vld [vmem:[#allocation11 + $0xc] sm:$0xf]
          %v3087 = vld [vmem:[#allocation11 + $0x10] sm:$0xf]
          %v3088 = vld [vmem:[#allocation11 + $0x14] sm:$0xf]
          %v3089 = vld [vmem:[#allocation11 + $0x18] sm:$0xf]
          %v3090 = vld [vmem:[#allocation11 + $0x1c] sm:$0xf]
          %v3091 = vld [vmem:[#allocation11 + $0x20] sm:$0xf]
          %v3092 = vld [vmem:[#allocation11 + $0x24] sm:$0xf]
          %v3093 = vld [vmem:[#allocation11 + $0x28] sm:$0xf]
          %v3094 = vld [vmem:[#allocation11 + $0x2c] sm:$0xf]
          %v3095 = vld [vmem:[#allocation11 + $0x30] sm:$0xf]
          %v3096 = vld [vmem:[#allocation11 + $0x34] sm:$0xf]
          %v3097 = vld [vmem:[#allocation11 + $0x38] sm:$0xf]
          %v3098 = vld [vmem:[#allocation11 + $0x3c] sm:$0xf]
          %v3099 = vld [vmem:[#allocation11 + $0x40] sm:$0xf]
          %v3100 = vld [vmem:[#allocation11 + $0x44] sm:$0xf]
          %v3101 = vld [vmem:[#allocation11 + $0x48] sm:$0xf]
          %v3102 = vld [vmem:[#allocation11 + $0x4c] sm:$0xf]
          %v3103 = vld [vmem:[#allocation11 + $0x50] sm:$0xf]
          %v3104 = vld [vmem:[#allocation11 + $0x54] sm:$0xf]
          %v3105 = vld [vmem:[#allocation11 + $0x58] sm:$0xf]
          %v3106 = vld [vmem:[#allocation11 + $0x5c] sm:$0xf]
          %v3107 = vld [vmem:[#allocation11 + $0x60] sm:$0xf]
          %v3108 = vld [vmem:[#allocation11 + $0x64] sm:$0xf]
          %v3109 = vld [vmem:[#allocation11 + $0x68] sm:$0xf]
          %v3110 = vld [vmem:[#allocation11 + $0x6c] sm:$0xf]
          %v3111 = vld [vmem:[#allocation11 + $0x70] sm:$0xf]
          %v3112 = vld [vmem:[#allocation11 + $0x74] sm:$0xf]
          %v3113 = vld [vmem:[#allocation11 + $0x78] sm:$0xf]
          %v3114 = vld [vmem:[#allocation11 + $0x7c] sm:$0xf]
          %v3147 = vunpack.c.l.b16 %v3083
          %v3148 = vunpack.c.l.b16 %v3084
          %v3149 = vunpack.c.l.b16 %v3085
          %v3150 = vunpack.c.l.b16 %v3086
          %v3151 = vunpack.c.l.b16 %v3087
          %v3152 = vunpack.c.l.b16 %v3088
          %v3153 = vunpack.c.l.b16 %v3089
          %v3154 = vunpack.c.l.b16 %v3090
          %v3155 = vunpack.c.l.b16 %v3091
          %v3156 = vunpack.c.l.b16 %v3092
          %v3157 = vunpack.c.l.b16 %v3093
          %v3158 = vunpack.c.l.b16 %v3094
          %v3159 = vunpack.c.l.b16 %v3095
          %v3160 = vunpack.c.l.b16 %v3096
          %v3161 = vunpack.c.l.b16 %v3097
          %v3162 = vunpack.c.l.b16 %v3098
          %v3163 = vunpack.c.l.b16 %v3099
          %v3164 = vunpack.c.l.b16 %v3100
          %v3165 = vunpack.c.l.b16 %v3101
          %v3166 = vunpack.c.l.b16 %v3102
          %v3167 = vunpack.c.l.b16 %v3103
          %v3168 = vunpack.c.l.b16 %v3104
          %v3169 = vunpack.c.l.b16 %v3105
          %v3170 = vunpack.c.l.b16 %v3106
          %v3171 = vunpack.c.l.b16 %v3107
          %v3172 = vunpack.c.l.b16 %v3108
          %v3173 = vunpack.c.l.b16 %v3109
          %v3174 = vunpack.c.l.b16 %v3110
          %v3175 = vunpack.c.l.b16 %v3111
          %v3176 = vunpack.c.l.b16 %v3112
          %v3177 = vunpack.c.l.b16 %v3113
          %v3178 = vunpack.c.l.b16 %v3114
          %v3179 = vpack.c.b16 %v3148, %v3147
          %v3180 = vpack.c.b16 %v3150, %v3149
          %v3181 = vpack.c.b16 %v3152, %v3151
          %v3182 = vpack.c.b16 %v3154, %v3153
          %v3183 = vpack.c.b16 %v3156, %v3155
          %v3184 = vpack.c.b16 %v3158, %v3157
          %v3185 = vpack.c.b16 %v3160, %v3159
          %v3186 = vpack.c.b16 %v3162, %v3161
          %v3187 = vpack.c.b16 %v3164, %v3163
          %v3188 = vpack.c.b16 %v3166, %v3165
          %v3189 = vpack.c.b16 %v3168, %v3167
          %v3190 = vpack.c.b16 %v3170, %v3169
          %v3191 = vpack.c.b16 %v3172, %v3171
          %v3192 = vpack.c.b16 %v3174, %v3173
          %v3193 = vpack.c.b16 %v3176, %v3175
          %v3194 = vpack.c.b16 %v3178, %v3177
          %3211 = vmatprep.subr.bf16.mxu0 0
          %3212 = vmatpush1.bf16.msra.mxu0 %v3186
          %3213 = vmatprep.subr.bf16.mxu0 0
          %3214 = vmatpush1.bf16.msra.mxu0 %v3185
          %3215 = vmatprep.subr.bf16.mxu0 0
          %3216 = vmatpush1.bf16.msra.mxu0 %v3184
          %3217 = vmatprep.subr.bf16.mxu0 0
          %3218 = vmatpush1.bf16.msra.mxu0 %v3183
          %3219 = vmatprep.subr.bf16.mxu0 0
          %3220 = vmatpush1.bf16.msra.mxu0 %v3182
          %3221 = vmatprep.subr.bf16.mxu0 0
          %3222 = vmatpush1.bf16.msra.mxu0 %v3181
          %3223 = vmatprep.subr.bf16.mxu0 0
          %3224 = vmatpush1.bf16.msra.mxu0 %v3180
          %3225 = vmatprep.subr.bf16.mxu0 0
          %3226 = vmatpush1.bf16.msra.mxu0 %v3179
          %3227 = vmatprep.subr.bf16.mxu0 0
          %3228 = vmatpush2.bf16.msra.mxu0 %v3194
          %3229 = vmatprep.subr.bf16.mxu0 0
          %3230 = vmatpush2.bf16.msra.mxu0 %v3193
          %3231 = vmatprep.subr.bf16.mxu0 0
          %3232 = vmatpush2.bf16.msra.mxu0 %v3192
          %3233 = vmatprep.subr.bf16.mxu0 0
          %3234 = vmatpush2.bf16.msra.mxu0 %v3191
          %3235 = vmatprep.subr.bf16.mxu0 0
          %3236 = vmatpush2.bf16.msra.mxu0 %v3190
          %3237 = vmatprep.subr.bf16.mxu0 0
          %3238 = vmatpush2.bf16.msra.mxu0 %v3189
          %3239 = vmatprep.subr.bf16.mxu0 0
          %3240 = vmatpush2.bf16.msra.mxu0 %v3188
          %3241 = vmatprep.subr.bf16.mxu0 0
          %3242 = vmatpush2.bf16.msra.mxu0 %v3187
          %3243 = vmatprep.mubr.bf16.mxu0 %v3080
          %3244 = vmatmul.mubr.bf16.gmra.mxu0 %v3079
          %v3245 = vpop.f32.mrf.mxu0
          %v3246 = vadd.f32 0.0, %v3245
          %v3247 = vpop.f32.mrf.mxu0
          %v3248 = vpop.f32.mrf.mxu0
          %v3249 = vadd.f32 0.0, %v3248
          %v3250 = vpop.f32.mrf.mxu0
          %3251 = vmatprep.mubr.bf16.mxu0 %v3082
          %3252 = vmatmul.mubr.bf16.gmra.mxu0 %v3081
          %v3253 = vpop.f32.mrf.mxu0
          %v3254 = vadd.f32 0.0, %v3253
          %v3255 = vpop.f32.mrf.mxu0
          %v3256 = vpop.f32.mrf.mxu0
          %v3257 = vadd.f32 0.0, %v3256
          %v3258 = vpop.f32.mrf.mxu0
          %3259 = vdwg.mxu0
          %v3260 = vadd.f32 %v3246, %v3249
          %v3261 = vadd.f32 %v3260, %v3254
          %v3262 = vadd.f32 %v3261, %v3257
          %v3263 = vrot.slane %v3262, 4
          %v3264 = vadd.f32 %v3262, %v3263
          %v3265 = vrot.slane %v3264, 2
          %v3266 = vadd.f32 %v3264, %v3265
          %v3267 = vrot.slane %v3266, 1
          %v3268 = vadd.f32 %v3266, %v3267
          %v3269 = vmul.f32 %v3246, %v3246
          %v3270 = vmul.f32 %v3249, %v3249
          %v3271 = vmul.f32 %v3254, %v3254
          %v3272 = vmul.f32 %v3257, %v3257
          %v3273 = vadd.f32 %v3269, %v3270
          %v3274 = vadd.f32 %v3273, %v3271
          %v3275 = vadd.f32 %v3274, %v3272
          %v3276 = vrot.slane %v3275, 4
          %v3277 = vadd.f32 %v3275, %v3276
          %v3278 = vrot.slane %v3277, 2
          %v3279 = vadd.f32 %v3277, %v3278
          %v3280 = vrot.slane %v3279, 1
          %v3281 = vadd.f32 %v3279, %v3280
          %v3282 = vmul.f32 %v3268, 0.03125
          %v3283 = vmul.f32 %v3281, 0.03125
          %v3284 = vmul.f32 %v3282, %v3282
          %v3285 = vsub.f32 %v3283, %v3284
          %v3286 = vmax.f32 %v3285, 0.0
          %v3287 = vadd.f32 %v3286, 1e-05
          %v3288 = vrsqrt.pop %v3287
          %v3289 = vmul.f32 %v2317, %v3288
          %v3290 = vmul.f32 %v3282, %v3289
          %v3291 = vsub.f32 %v2318, %v3290
          %v3292 = vmul.f32 %v3246, %v3289
          %v3293 = vmul.f32 %v3249, %v3289
          %v3294 = vmul.f32 %v3254, %v3289
          %v3295 = vmul.f32 %v3257, %v3289
          %v3296 = vadd.f32 %v3292, %v3291
          %v3297 = vadd.f32 %v3293, %v3291
          %v3298 = vadd.f32 %v3294, %v3291
          %v3299 = vadd.f32 %v3295, %v3291
          %v3300 = vmax.f32 %v3296, 0.0
          %v3301 = vmax.f32 %v3297, 0.0
          %v3302 = vmax.f32 %v3298, 0.0
          %v3303 = vmax.f32 %v3299, 0.0
          %3304 = vst [vmem:[#allocation14] sm:$0xff] %v3300
          %3305 = vst [vmem:[#allocation14 + $0x8] sm:$0xff] %v3301
          %3306 = vst [vmem:[#allocation14 + $0x10] sm:$0xff] %v3302
          %3307 = vst [vmem:[#allocation14 + $0x18] sm:$0xff] %v3303
        $region68: #{tpu_custom_call.1} parent=39 // pred_fallthru
          _
        // Predicated region
        $region69: #{tpu_custom_call.1} parent=39 // pred_check
          %p3308 = pneg %p145
        $region70: #{tpu_custom_call.1} parent=39 // pred_check_branch
          %3310 = sbr.rel (%p3308) target = $region72
        $region71: #{tpu_custom_call.1} parent=39 // pred_region
          %s3312 = ssub.s32 512, 512
          %3313 = vsyncadd [#allocation7], %s3312
          %s3314 = sshll.u32 [#allocation14], 4
          %s3315 = int_to_ptr.vmem [resolvable:$true] %s3314
          %3320 = dma.vmem_to_hbm [thread:$0]  %s3315, 512, %s5, [#allocation7], 128, 128, 8
        $region72: #{tpu_custom_call.1} parent=39 // pred_fallthru
          _
        // Predicated region
        $region73: #{tpu_custom_call.1} parent=39 // pred_check
          %p3321 = pneg %p145
        $region74: #{tpu_custom_call.1} parent=39 // pred_check_branch
          %3323 = sbr.rel (%p3321) target = $region76
        $region75: #{tpu_custom_call.1} parent=39 // pred_region
          %3324 = dma.done [#allocation7], 512
        $region76: #{tpu_custom_call.1} parent=39 // pred_fallthru
          _
      $region40: #{tpu_custom_call.1} parent=5 // pred_fallthru
        _
      %p3325 = scmp.le.s32.totalorder 2, %s17
      // Predicated region
      $region77: #{tpu_custom_call.1} parent=5 // pred_check
        %p3326 = pneg %p3325
      $region78: #{tpu_custom_call.1} parent=5 // pred_check_branch
        %3328 = sbr.rel (%p3326) target = $region80
      $region79: #{tpu_custom_call.1} parent=5 // pred_region
        %s3329 = ssub.s32 %s17, 2
      $region80: #{tpu_custom_call.1} parent=5 // pred_fallthru
        _
    $region6: #{tpu_custom_call.1} parent=1 // loop_footer
      %s21 = sadd.s32 1, %s17
    $region7: #{tpu_custom_call.1} parent=1 // loop_footer_branch
      %16 = sbr.rel target = $region3
    $region8: #{tpu_custom_call.1} parent=1 // loop_exit
      _
    %3330 = vsyncpa [#allocation6], 1
    %s3331 = scalar_lea.sflag [#allocation6], 1
    %3332 = vsyncpa %s3331, 1
    %3333 = vsyncpa [#allocation9], 1
    %3334 = vsyncpa [#allocation12], 1
    %3335 = vsyncpa [#allocation7], 1
    %s3336 = scalar_lea.sflag [#allocation7], 1
    %3337 = vsyncpa %s3336, 1

</llo_original>
